<compile_context>
chip_gen: v5e
topology: v5e:2x2
jax: 0.10.0
libtpu: 0.0.40
codegen_flags: <defaults>
</compile_context>

<pallas_src>
import jax
import jax.numpy as jnp
from jax.experimental import pallas as pl
from jax.experimental.pallas import tpu as pltpu


LEAKY_SLOPE = 0.01   # PyTorch nn.LeakyReLU default negative_slope
_MAX_BT = 16         # max batch elements per grid step (VMEM: ~20 MiB dbl-buffered)
_VMEM_LIMIT = 48 * 1024 * 1024   # scoped VMEM limit (fits every generation)


def _corr_repr_kernel(xr_ref, xi_ref, xd_ref,
                      w1_ref, b1_ref, w2_ref, b2_ref,
                      out_ref):
    """One grid step = Bt batch elements, channels-last tiles.

    xr/xi/xd_ref : (Bt, HW, C)   f32, C on lanes (dense), HW on sublanes.
    w1 (3, C, 64), b1 (3, 64), w2 (3, 64, 3), b2 (3, 3)
    out_ref      : (3, Bt, HW, C) -> [rgb_fuse, ir_fuse, depth_fuse].
    """
    # ---- AdaptiveAvgPool2d((1,1)): per-channel mean over HW (sublane reduce) ----
    pr = jnp.mean(xr_ref[...], axis=1)            # (Bt, C)
    pi = jnp.mean(xi_ref[...], axis=1)
    pd = jnp.mean(xd_ref[...], axis=1)

    # ---- per-modality MLP: Linear(128,64) -> LeakyReLU -> Linear(64,3) ----
    def mlp(p, m):
        h = jnp.dot(p, w1_ref[m], preferred_element_type=jnp.float32)
        h = h + b1_ref[m][None, :]
        h = jnp.where(h > 0, h, LEAKY_SLOPE * h)
        c = jnp.dot(h, w2_ref[m], preferred_element_type=jnp.float32)
        return c + b2_ref[m][None, :]             # (Bt, 3)

    c_rgb = mlp(pr, 0)
    c_ir = mlp(pi, 1)
    c_dep = mlp(pd, 2)

    # ---- cross-modal affine fusion: whole-tile broadcast expressions ----
    def coef(c, j):
        return c[:, j:j + 1][:, :, None]          # (Bt, 1, 1) broadcast scalar

    out_ref[0] = (xi_ref[...] * coef(c_rgb, 0)
                  + xd_ref[...] * coef(c_rgb, 1) + coef(c_rgb, 2))
    out_ref[1] = (xr_ref[...] * coef(c_ir, 0)
                  + xd_ref[...] * coef(c_ir, 1) + coef(c_ir, 2))
    out_ref[2] = (xr_ref[...] * coef(c_dep, 0)
                  + xi_ref[...] * coef(c_dep, 1) + coef(c_dep, 2))


def _num_tensorcores():
    """TensorCores sharing the 'parallel' grid axis (v7x: 2; v5e/v6e: 1)."""
    try:
        dev = jax.devices()[0]
        for attr in ("num_cores", "core_count", "num_tensorcores"):
            n = getattr(dev, attr, None)
            if isinstance(n, int) and n > 0:
                return n
    except Exception:
        pass
    return 1


def _pick_block_batch(B, max_bt=_MAX_BT):
    """Pick the batch block size.

    Single-TC chips: largest divisor of B <= cap (no benefit to extra steps).
    Multi-TC chips : largest divisor whose step count is a multiple of the
    core count (balanced megacore split), falling back gracefully.
    """
    divisors = [d for d in range(1, min(B, max_bt) + 1) if B % d == 0]
    if not divisors:
        return 1
    cores = _num_tensorcores()
    if cores <= 1:
        return divisors[-1]
    for d in reversed(divisors):
        steps = B // d
        if steps >= cores and steps % cores == 0:
            return d
    for d in reversed(divisors):
        if B // d >= cores:
            return d
    return divisors[-1]


def corr_repr_pallas(x_rgb, x_ir, x_depth, params, block_batch=None):
    """Channels-last entry point.

    x_*: (B, HW, C) float32 activations (C must be 128).
    Returns fused slab (3, B, HW, C):
        [0] = rgb_fuse, [1] = ir_fuse, [2] = depth_fuse.
    """
    B, HW, C = x_rgb.shape
    w1, b1, w2, b2 = params  # (3,C,64), (3,64), (3,64,3), (3,3)

    bt = block_batch if block_batch is not None else _pick_block_batch(B)
    assert B % bt == 0, (B, bt)
    grid = (B // bt,)

    act_spec = pl.BlockSpec((bt, HW, C), lambda g: (g, 0, 0))
    out_spec = pl.BlockSpec((3, bt, HW, C), lambda g: (0, g, 0, 0))

    # HBM-roofline hint for XLA scheduling around this bandwidth-bound call.
    elem_bytes = 4
    bytes_accessed = 6 * B * HW * C * elem_bytes \
        + (w1.size + b1.size + w2.size + b2.size) * elem_bytes
    flops = B * (3 * C * HW                      # pooling
                 + 2 * 3 * (C * 64 + 64 * 3)     # three MLPs
                 + 3 * 5 * C * HW)               # affine fusion

    fused = pl.pallas_call(
        _corr_repr_kernel,
        out_shape=jax.ShapeDtypeStruct((3, B, HW, C), jnp.float32),
        grid_spec=pltpu.PrefetchScalarGridSpec(
            num_scalar_prefetch=0,
            grid=grid,
            in_specs=[
                act_spec, act_spec, act_spec,
                # Constant index_maps -> weights stay resident across steps.
                pl.BlockSpec((3, C, 64), lambda g: (0, 0, 0)),
                pl.BlockSpec((3, 64), lambda g: (0, 0)),
                pl.BlockSpec((3, 64, 3), lambda g: (0, 0, 0)),
                pl.BlockSpec((3, 3), lambda g: (0, 0)),
            ],
            out_specs=out_spec,
        ),
        compiler_params=pltpu.CompilerParams(
            dimension_semantics=("parallel",),
            vmem_limit_bytes=_VMEM_LIMIT),
        cost_estimate=pl.CostEstimate(
            flops=flops, transcendentals=0, bytes_accessed=bytes_accessed),
    )(x_rgb, x_ir, x_depth, w1, b1, w2, b2)
    return fused


def surf_cr_forward(x_rgb, x_ir, x_depth, params):
    """SURF_CR forward from post-backbone features onward (NCHW interface).

    TODO(synk): special_bone_* (resnet18_se), modality drop and shared_bone
    (layer3/layer4/avgpool/fc) definitions are not provided; only the
    Corr_Repr stage and the channel concat are implemented.
    """
    B, C, H, W = x_rgb.shape
    HW = H * W

    # NCHW -> channels-last (B, HW, C) so C=128 rides the lane axis in-kernel.
    def to_cl(x):
        return x.reshape(B, C, HW).transpose(0, 2, 1)

    fused = corr_repr_pallas(to_cl(x_rgb), to_cl(x_ir), to_cl(x_depth), params)
    # fused: (3, B, HW, C)

    # Back to the PyTorch NCHW layout for parity with the reference module.
    # (In an NHWC end-to-end pipeline these transposes disappear; shared_bone
    # would consume the channels-last slab directly.)
    x_cat = fused.transpose(1, 0, 3, 2).reshape(B, 3 * C, H, W)
    fused_nchw = fused.transpose(0, 1, 3, 2).reshape(3, B, C, H, W)
    f_rgb, f_ir, f_depth = fused_nchw[0], fused_nchw[1], fused_nchw[2]
    return x_cat, (f_rgb, f_ir, f_depth)


def _corr_repr_reference(x_rgb, x_ir, x_depth, params):
    """Pure-JAX reference matching the PyTorch Corr_Repr semantics (NCHW)."""
    w1, b1, w2, b2 = params

    def mpe(x, m):
        pooled = jnp.mean(x, axis=(2, 3))                     # (B, C)
        h = pooled @ w1[m] + b1[m]
        h = jnp.where(h > 0, h, LEAKY_SLOPE * h)
        return h @ w2[m] + b2[m]                              # (B, 3)

    c_rgb = mpe(x_rgb, 0)[:, :, None, None, None]
    c_ir = mpe(x_ir, 1)[:, :, None, None, None]
    c_dep = mpe(x_depth, 2)[:, :, None, None, None]

    o_rgb = x_ir * c_rgb[:, 0] + x_depth * c_rgb[:, 1] + c_rgb[:, 2]
    o_ir = x_rgb * c_ir[:, 0] + x_depth * c_ir[:, 1] + c_ir[:, 2]
    o_dep = x_rgb * c_dep[:, 0] + x_ir * c_dep[:, 1] + c_dep[:, 2]
    return o_rgb, o_ir, o_dep


def init_params(key):
    """Deterministic stand-ins for mpe1/mpe2/mpe3 weights (stacked on axis 0)."""
    k1, k2, k3, k4 = jax.random.split(key, 4)
    w1 = jax.random.normal(k1, (3, 128, 64), jnp.float32) * 0.05
    b1 = jax.random.normal(k2, (3, 64), jnp.float32) * 0.05
    w2 = jax.random.normal(k3, (3, 64, 3), jnp.float32) * 0.05
    b2 = jax.random.normal(k4, (3, 3), jnp.float32) * 0.05
    return w1, b1, w2, b2


if __name__ == "__main__":
    key = jax.random.PRNGKey(0)
    kp, kr, ki, kd = jax.random.split(key, 4)

    B, C, H, W = 2, 128, 14, 14  # C=128 is required by the Linear(128, 64)
    params = init_params(kp)
    x_rgb = jax.random.normal(kr, (B, C, H, W), jnp.float32)
    x_ir = jax.random.normal(ki, (B, C, H, W), jnp.float32)
    x_depth = jax.random.normal(kd, (B, C, H, W), jnp.float32)

    x_cat, (f_rgb, f_ir, f_depth) = jax.block_until_ready(
        surf_cr_forward(x_rgb, x_ir, x_depth, params))

    # Correctness check vs. pure-JAX reference of Corr_Repr.
    r_rgb, r_ir, r_depth = _corr_repr_reference(x_rgb, x_ir, x_depth, params)
    for got, ref in ((f_rgb, r_rgb), (f_ir, r_ir), (f_depth, r_depth)):
        err = float(jnp.max(jnp.abs(got - ref)))
        assert err < 1e-4, f"max abs err {err}"
    cat_ref = jnp.concatenate((r_rgb, r_ir, r_depth), axis=1)
    cat_err = float(jnp.max(jnp.abs(x_cat - cat_ref)))
    assert cat_err < 1e-4, f"cat max abs err {cat_err}"
    assert x_cat.shape == (B, 3 * C, H, W)

    print("KERNEL_OK")
</pallas_src>

<mosaic_0001>
module attributes {stable_mosaic.version = 11 : i64} {
  func.func @_corr_repr_kernel(%arg0: i32, %arg1: memref<2x196x128xf32, #tpu.memory_space<vmem>>, %arg2: memref<2x196x128xf32, #tpu.memory_space<vmem>>, %arg3: memref<2x196x128xf32, #tpu.memory_space<vmem>>, %arg4: memref<3x128x64xf32, #tpu.memory_space<vmem>>, %arg5: memref<3x64xf32, #tpu.memory_space<vmem>>, %arg6: memref<3x64x3xf32, #tpu.memory_space<vmem>>, %arg7: memref<3x3xf32, #tpu.memory_space<vmem>>, %arg8: memref<3x2x196x128xf32, #tpu.memory_space<vmem>>) attributes {dimension_semantics = [#tpu.dimension_semantics<parallel>], iteration_bounds = array<i64: 1>, scalar_prefetch = 0 : i64, scratch_operands = 0 : i64, tpu.core_type = #tpu.core_type<tc>, window_params = [{transform_indices = @transform_0, window_bounds = array<i64: 2, 196, 128>}, {transform_indices = @transform_1, window_bounds = array<i64: 2, 196, 128>}, {transform_indices = @transform_2, window_bounds = array<i64: 2, 196, 128>}, {pipeline_mode = #tpu.pipeline_mode<synchronous>, transform_indices = @transform_3, window_bounds = array<i64: 3, 128, 64>}, {pipeline_mode = #tpu.pipeline_mode<synchronous>, transform_indices = @transform_4, window_bounds = array<i64: 3, 64>}, {pipeline_mode = #tpu.pipeline_mode<synchronous>, transform_indices = @transform_5, window_bounds = array<i64: 3, 64, 3>}, {pipeline_mode = #tpu.pipeline_mode<synchronous>, transform_indices = @transform_6, window_bounds = array<i64: 3, 3>}, {transform_indices = @transform_7, window_bounds = array<i64: 3, 2, 196, 128>}]} {
    %c0 = arith.constant 0 : index
    %c0_0 = arith.constant 0 : index
    %c0_1 = arith.constant 0 : index
    %0 = vector.load %arg1[%c0, %c0_0, %c0_1] : memref<2x196x128xf32, #tpu.memory_space<vmem>>, vector<2x196x128xf32>
    %cst = arith.constant dense<0.000000e+00> : vector<2x128xf32>
    %1 = vector.multi_reduction <add>, %0, %cst [1] : vector<2x196x128xf32> to vector<2x128xf32>
    %cst_2 = arith.constant 1.960000e+02 : f32
    %2 = vector.broadcast %cst_2 : f32 to vector<2x128xf32>
    %3 = arith.divf %1, %2 : vector<2x128xf32>
    %c0_3 = arith.constant 0 : index
    %c0_4 = arith.constant 0 : index
    %c0_5 = arith.constant 0 : index
    %4 = vector.load %arg2[%c0_3, %c0_4, %c0_5] : memref<2x196x128xf32, #tpu.memory_space<vmem>>, vector<2x196x128xf32>
    %cst_6 = arith.constant dense<0.000000e+00> : vector<2x128xf32>
    %5 = vector.multi_reduction <add>, %4, %cst_6 [1] : vector<2x196x128xf32> to vector<2x128xf32>
    %cst_7 = arith.constant 1.960000e+02 : f32
    %6 = vector.broadcast %cst_7 : f32 to vector<2x128xf32>
    %7 = arith.divf %5, %6 : vector<2x128xf32>
    %c0_8 = arith.constant 0 : index
    %c0_9 = arith.constant 0 : index
    %c0_10 = arith.constant 0 : index
    %8 = vector.load %arg3[%c0_8, %c0_9, %c0_10] : memref<2x196x128xf32, #tpu.memory_space<vmem>>, vector<2x196x128xf32>
    %cst_11 = arith.constant dense<0.000000e+00> : vector<2x128xf32>
    %9 = vector.multi_reduction <add>, %8, %cst_11 [1] : vector<2x196x128xf32> to vector<2x128xf32>
    %cst_12 = arith.constant 1.960000e+02 : f32
    %10 = vector.broadcast %cst_12 : f32 to vector<2x128xf32>
    %11 = arith.divf %9, %10 : vector<2x128xf32>
    %c0_13 = arith.constant 0 : index
    %c0_14 = arith.constant 0 : index
    %c0_15 = arith.constant 0 : index
    %12 = vector.load %arg4[%c0_13, %c0_14, %c0_15] : memref<3x128x64xf32, #tpu.memory_space<vmem>>, vector<1x128x64xf32>
    %13 = vector.shape_cast %12 : vector<1x128x64xf32> to vector<128x64xf32>
    %cst_16 = arith.constant dense<0.000000e+00> : vector<2x64xf32>
    %14 = tpu.matmul %3, %13, %cst_16 {dimension_numbers = #tpu.dot_dimension_numbers<[1], [0], [0], [1], [0, 0, 1, 1], [], []>} : vector<2x128xf32>, vector<128x64xf32>, vector<2x64xf32> -> vector<2x64xf32>
    %c0_17 = arith.constant 0 : index
    %c0_18 = arith.constant 0 : index
    %15 = vector.load %arg5[%c0_17, %c0_18] : memref<3x64xf32, #tpu.memory_space<vmem>>, vector<1x64xf32>
    %16 = vector.shape_cast %15 : vector<1x64xf32> to vector<64xf32>
    %17 = vector.shape_cast %16 : vector<64xf32> to vector<1x64xf32>
    %18 = vector.broadcast %17 : vector<1x64xf32> to vector<2x64xf32>
    %19 = arith.addf %14, %18 : vector<2x64xf32>
    %cst_19 = arith.constant 0.000000e+00 : f32
    %20 = vector.broadcast %cst_19 : f32 to vector<2x64xf32>
    %21 = arith.cmpf ogt, %19, %20 : vector<2x64xf32>
    %cst_20 = arith.constant 0.00999999977 : f32
    %22 = vector.broadcast %cst_20 : f32 to vector<2x64xf32>
    %23 = arith.mulf %22, %19 : vector<2x64xf32>
    %24 = arith.select %21, %19, %23 : vector<2x64xi1>, vector<2x64xf32>
    %c0_21 = arith.constant 0 : index
    %c0_22 = arith.constant 0 : index
    %c0_23 = arith.constant 0 : index
    %25 = vector.load %arg6[%c0_21, %c0_22, %c0_23] : memref<3x64x3xf32, #tpu.memory_space<vmem>>, vector<1x64x3xf32>
    %26 = vector.shape_cast %25 : vector<1x64x3xf32> to vector<64x3xf32>
    %cst_24 = arith.constant dense<0.000000e+00> : vector<2x3xf32>
    %27 = tpu.matmul %24, %26, %cst_24 {dimension_numbers = #tpu.dot_dimension_numbers<[1], [0], [0], [1], [0, 0, 1, 1], [], []>} : vector<2x64xf32>, vector<64x3xf32>, vector<2x3xf32> -> vector<2x3xf32>
    %c0_25 = arith.constant 0 : index
    %c0_26 = arith.constant 0 : index
    %28 = vector.load %arg7[%c0_25, %c0_26] : memref<3x3xf32, #tpu.memory_space<vmem>>, vector<1x3xf32>
    %29 = vector.shape_cast %28 : vector<1x3xf32> to vector<3xf32>
    %30 = vector.shape_cast %29 : vector<3xf32> to vector<1x3xf32>
    %31 = vector.broadcast %30 : vector<1x3xf32> to vector<2x3xf32>
    %32 = arith.addf %27, %31 : vector<2x3xf32>
    %c1 = arith.constant 1 : index
    %c0_27 = arith.constant 0 : index
    %c0_28 = arith.constant 0 : index
    %33 = vector.load %arg4[%c1, %c0_27, %c0_28] : memref<3x128x64xf32, #tpu.memory_space<vmem>>, vector<1x128x64xf32>
    %34 = vector.shape_cast %33 : vector<1x128x64xf32> to vector<128x64xf32>
    %cst_29 = arith.constant dense<0.000000e+00> : vector<2x64xf32>
    %35 = tpu.matmul %7, %34, %cst_29 {dimension_numbers = #tpu.dot_dimension_numbers<[1], [0], [0], [1], [0, 0, 1, 1], [], []>} : vector<2x128xf32>, vector<128x64xf32>, vector<2x64xf32> -> vector<2x64xf32>
    %c1_30 = arith.constant 1 : index
    %c0_31 = arith.constant 0 : index
    %36 = vector.load %arg5[%c1_30, %c0_31] : memref<3x64xf32, #tpu.memory_space<vmem>>, vector<1x64xf32>
    %37 = vector.shape_cast %36 : vector<1x64xf32> to vector<64xf32>
    %38 = vector.shape_cast %37 : vector<64xf32> to vector<1x64xf32>
    %39 = vector.broadcast %38 : vector<1x64xf32> to vector<2x64xf32>
    %40 = arith.addf %35, %39 : vector<2x64xf32>
    %cst_32 = arith.constant 0.000000e+00 : f32
    %41 = vector.broadcast %cst_32 : f32 to vector<2x64xf32>
    %42 = arith.cmpf ogt, %40, %41 : vector<2x64xf32>
    %cst_33 = arith.constant 0.00999999977 : f32
    %43 = vector.broadcast %cst_33 : f32 to vector<2x64xf32>
    %44 = arith.mulf %43, %40 : vector<2x64xf32>
    %45 = arith.select %42, %40, %44 : vector<2x64xi1>, vector<2x64xf32>
    %c1_34 = arith.constant 1 : index
    %c0_35 = arith.constant 0 : index
    %c0_36 = arith.constant 0 : index
    %46 = vector.load %arg6[%c1_34, %c0_35, %c0_36] : memref<3x64x3xf32, #tpu.memory_space<vmem>>, vector<1x64x3xf32>
    %47 = vector.shape_cast %46 : vector<1x64x3xf32> to vector<64x3xf32>
    %cst_37 = arith.constant dense<0.000000e+00> : vector<2x3xf32>
    %48 = tpu.matmul %45, %47, %cst_37 {dimension_numbers = #tpu.dot_dimension_numbers<[1], [0], [0], [1], [0, 0, 1, 1], [], []>} : vector<2x64xf32>, vector<64x3xf32>, vector<2x3xf32> -> vector<2x3xf32>
    %c1_38 = arith.constant 1 : index
    %c0_39 = arith.constant 0 : index
    %49 = vector.load %arg7[%c1_38, %c0_39] : memref<3x3xf32, #tpu.memory_space<vmem>>, vector<1x3xf32>
    %50 = vector.shape_cast %49 : vector<1x3xf32> to vector<3xf32>
    %51 = vector.shape_cast %50 : vector<3xf32> to vector<1x3xf32>
    %52 = vector.broadcast %51 : vector<1x3xf32> to vector<2x3xf32>
    %53 = arith.addf %48, %52 : vector<2x3xf32>
    %c2 = arith.constant 2 : index
    %c0_40 = arith.constant 0 : index
    %c0_41 = arith.constant 0 : index
    %54 = vector.load %arg4[%c2, %c0_40, %c0_41] : memref<3x128x64xf32, #tpu.memory_space<vmem>>, vector<1x128x64xf32>
    %55 = vector.shape_cast %54 : vector<1x128x64xf32> to vector<128x64xf32>
    %cst_42 = arith.constant dense<0.000000e+00> : vector<2x64xf32>
    %56 = tpu.matmul %11, %55, %cst_42 {dimension_numbers = #tpu.dot_dimension_numbers<[1], [0], [0], [1], [0, 0, 1, 1], [], []>} : vector<2x128xf32>, vector<128x64xf32>, vector<2x64xf32> -> vector<2x64xf32>
    %c2_43 = arith.constant 2 : index
    %c0_44 = arith.constant 0 : index
    %57 = vector.load %arg5[%c2_43, %c0_44] : memref<3x64xf32, #tpu.memory_space<vmem>>, vector<1x64xf32>
    %58 = vector.shape_cast %57 : vector<1x64xf32> to vector<64xf32>
    %59 = vector.shape_cast %58 : vector<64xf32> to vector<1x64xf32>
    %60 = vector.broadcast %59 : vector<1x64xf32> to vector<2x64xf32>
    %61 = arith.addf %56, %60 : vector<2x64xf32>
    %cst_45 = arith.constant 0.000000e+00 : f32
    %62 = vector.broadcast %cst_45 : f32 to vector<2x64xf32>
    %63 = arith.cmpf ogt, %61, %62 : vector<2x64xf32>
    %cst_46 = arith.constant 0.00999999977 : f32
    %64 = vector.broadcast %cst_46 : f32 to vector<2x64xf32>
    %65 = arith.mulf %64, %61 : vector<2x64xf32>
    %66 = arith.select %63, %61, %65 : vector<2x64xi1>, vector<2x64xf32>
    %c2_47 = arith.constant 2 : index
    %c0_48 = arith.constant 0 : index
    %c0_49 = arith.constant 0 : index
    %67 = vector.load %arg6[%c2_47, %c0_48, %c0_49] : memref<3x64x3xf32, #tpu.memory_space<vmem>>, vector<1x64x3xf32>
    %68 = vector.shape_cast %67 : vector<1x64x3xf32> to vector<64x3xf32>
    %cst_50 = arith.constant dense<0.000000e+00> : vector<2x3xf32>
    %69 = tpu.matmul %66, %68, %cst_50 {dimension_numbers = #tpu.dot_dimension_numbers<[1], [0], [0], [1], [0, 0, 1, 1], [], []>} : vector<2x64xf32>, vector<64x3xf32>, vector<2x3xf32> -> vector<2x3xf32>
    %c2_51 = arith.constant 2 : index
    %c0_52 = arith.constant 0 : index
    %70 = vector.load %arg7[%c2_51, %c0_52] : memref<3x3xf32, #tpu.memory_space<vmem>>, vector<1x3xf32>
    %71 = vector.shape_cast %70 : vector<1x3xf32> to vector<3xf32>
    %72 = vector.shape_cast %71 : vector<3xf32> to vector<1x3xf32>
    %73 = vector.broadcast %72 : vector<1x3xf32> to vector<2x3xf32>
    %74 = arith.addf %69, %73 : vector<2x3xf32>
    %c0_53 = arith.constant 0 : index
    %c0_54 = arith.constant 0 : index
    %c0_55 = arith.constant 0 : index
    %75 = vector.load %arg2[%c0_53, %c0_54, %c0_55] : memref<2x196x128xf32, #tpu.memory_space<vmem>>, vector<2x196x128xf32>
    %76 = vector.extract_strided_slice %32 {offsets = [0, 0], sizes = [2, 1], strides = [1, 1]} : vector<2x3xf32> to vector<2x1xf32>
    %77 = vector.shape_cast %76 : vector<2x1xf32> to vector<2x1x1xf32>
    %78 = vector.broadcast %77 : vector<2x1x1xf32> to vector<2x196x128xf32>
    %79 = arith.mulf %75, %78 : vector<2x196x128xf32>
    %c0_56 = arith.constant 0 : index
    %c0_57 = arith.constant 0 : index
    %c0_58 = arith.constant 0 : index
    %80 = vector.load %arg3[%c0_56, %c0_57, %c0_58] : memref<2x196x128xf32, #tpu.memory_space<vmem>>, vector<2x196x128xf32>
    %81 = vector.extract_strided_slice %32 {offsets = [0, 1], sizes = [2, 1], strides = [1, 1]} : vector<2x3xf32> to vector<2x1xf32>
    %82 = vector.shape_cast %81 : vector<2x1xf32> to vector<2x1x1xf32>
    %83 = vector.broadcast %82 : vector<2x1x1xf32> to vector<2x196x128xf32>
    %84 = arith.mulf %80, %83 : vector<2x196x128xf32>
    %85 = arith.addf %79, %84 : vector<2x196x128xf32>
    %86 = vector.extract_strided_slice %32 {offsets = [0, 2], sizes = [2, 1], strides = [1, 1]} : vector<2x3xf32> to vector<2x1xf32>
    %87 = vector.shape_cast %86 : vector<2x1xf32> to vector<2x1x1xf32>
    %88 = vector.broadcast %87 : vector<2x1x1xf32> to vector<2x196x128xf32>
    %89 = arith.addf %85, %88 : vector<2x196x128xf32>
    %c0_59 = arith.constant 0 : index
    %c0_60 = arith.constant 0 : index
    %c0_61 = arith.constant 0 : index
    %c0_62 = arith.constant 0 : index
    %90 = vector.load %arg8[%c0_59, %c0_60, %c0_61, %c0_62] : memref<3x2x196x128xf32, #tpu.memory_space<vmem>>, vector<1x2x196x128xf32>
    %91 = vector.shape_cast %90 : vector<1x2x196x128xf32> to vector<2x196x128xf32>
    %92 = vector.shape_cast %89 : vector<2x196x128xf32> to vector<1x2x196x128xf32>
    tpu.vector_store %arg8[%c0_59, %c0_60, %c0_61, %c0_62], %92 {strides = array<i32>} : memref<3x2x196x128xf32, #tpu.memory_space<vmem>>, vector<1x2x196x128xf32>,
    %c0_63 = arith.constant 0 : index
    %c0_64 = arith.constant 0 : index
    %c0_65 = arith.constant 0 : index
    %93 = vector.load %arg1[%c0_63, %c0_64, %c0_65] : memref<2x196x128xf32, #tpu.memory_space<vmem>>, vector<2x196x128xf32>
    %94 = vector.extract_strided_slice %53 {offsets = [0, 0], sizes = [2, 1], strides = [1, 1]} : vector<2x3xf32> to vector<2x1xf32>
    %95 = vector.shape_cast %94 : vector<2x1xf32> to vector<2x1x1xf32>
    %96 = vector.broadcast %95 : vector<2x1x1xf32> to vector<2x196x128xf32>
    %97 = arith.mulf %93, %96 : vector<2x196x128xf32>
    %c0_66 = arith.constant 0 : index
    %c0_67 = arith.constant 0 : index
    %c0_68 = arith.constant 0 : index
    %98 = vector.load %arg3[%c0_66, %c0_67, %c0_68] : memref<2x196x128xf32, #tpu.memory_space<vmem>>, vector<2x196x128xf32>
    %99 = vector.extract_strided_slice %53 {offsets = [0, 1], sizes = [2, 1], strides = [1, 1]} : vector<2x3xf32> to vector<2x1xf32>
    %100 = vector.shape_cast %99 : vector<2x1xf32> to vector<2x1x1xf32>
    %101 = vector.broadcast %100 : vector<2x1x1xf32> to vector<2x196x128xf32>
    %102 = arith.mulf %98, %101 : vector<2x196x128xf32>
    %103 = arith.addf %97, %102 : vector<2x196x128xf32>
    %104 = vector.extract_strided_slice %53 {offsets = [0, 2], sizes = [2, 1], strides = [1, 1]} : vector<2x3xf32> to vector<2x1xf32>
    %105 = vector.shape_cast %104 : vector<2x1xf32> to vector<2x1x1xf32>
    %106 = vector.broadcast %105 : vector<2x1x1xf32> to vector<2x196x128xf32>
    %107 = arith.addf %103, %106 : vector<2x196x128xf32>
    %c1_69 = arith.constant 1 : index
    %c0_70 = arith.constant 0 : index
    %c0_71 = arith.constant 0 : index
    %c0_72 = arith.constant 0 : index
    %108 = vector.load %arg8[%c1_69, %c0_70, %c0_71, %c0_72] : memref<3x2x196x128xf32, #tpu.memory_space<vmem>>, vector<1x2x196x128xf32>
    %109 = vector.shape_cast %108 : vector<1x2x196x128xf32> to vector<2x196x128xf32>
    %110 = vector.shape_cast %107 : vector<2x196x128xf32> to vector<1x2x196x128xf32>
    tpu.vector_store %arg8[%c1_69, %c0_70, %c0_71, %c0_72], %110 {strides = array<i32>} : memref<3x2x196x128xf32, #tpu.memory_space<vmem>>, vector<1x2x196x128xf32>,
    %c0_73 = arith.constant 0 : index
    %c0_74 = arith.constant 0 : index
    %c0_75 = arith.constant 0 : index
    %111 = vector.load %arg1[%c0_73, %c0_74, %c0_75] : memref<2x196x128xf32, #tpu.memory_space<vmem>>, vector<2x196x128xf32>
    %112 = vector.extract_strided_slice %74 {offsets = [0, 0], sizes = [2, 1], strides = [1, 1]} : vector<2x3xf32> to vector<2x1xf32>
    %113 = vector.shape_cast %112 : vector<2x1xf32> to vector<2x1x1xf32>
    %114 = vector.broadcast %113 : vector<2x1x1xf32> to vector<2x196x128xf32>
    %115 = arith.mulf %111, %114 : vector<2x196x128xf32>
    %c0_76 = arith.constant 0 : index
    %c0_77 = arith.constant 0 : index
    %c0_78 = arith.constant 0 : index
    %116 = vector.load %arg2[%c0_76, %c0_77, %c0_78] : memref<2x196x128xf32, #tpu.memory_space<vmem>>, vector<2x196x128xf32>
    %117 = vector.extract_strided_slice %74 {offsets = [0, 1], sizes = [2, 1], strides = [1, 1]} : vector<2x3xf32> to vector<2x1xf32>
    %118 = vector.shape_cast %117 : vector<2x1xf32> to vector<2x1x1xf32>
    %119 = vector.broadcast %118 : vector<2x1x1xf32> to vector<2x196x128xf32>
    %120 = arith.mulf %116, %119 : vector<2x196x128xf32>
    %121 = arith.addf %115, %120 : vector<2x196x128xf32>
    %122 = vector.extract_strided_slice %74 {offsets = [0, 2], sizes = [2, 1], strides = [1, 1]} : vector<2x3xf32> to vector<2x1xf32>
    %123 = vector.shape_cast %122 : vector<2x1xf32> to vector<2x1x1xf32>
    %124 = vector.broadcast %123 : vector<2x1x1xf32> to vector<2x196x128xf32>
    %125 = arith.addf %121, %124 : vector<2x196x128xf32>
    %c2_79 = arith.constant 2 : index
    %c0_80 = arith.constant 0 : index
    %c0_81 = arith.constant 0 : index
    %c0_82 = arith.constant 0 : index
    %126 = vector.load %arg8[%c2_79, %c0_80, %c0_81, %c0_82] : memref<3x2x196x128xf32, #tpu.memory_space<vmem>>, vector<1x2x196x128xf32>
    %127 = vector.shape_cast %126 : vector<1x2x196x128xf32> to vector<2x196x128xf32>
    %128 = vector.shape_cast %125 : vector<2x196x128xf32> to vector<1x2x196x128xf32>
    tpu.vector_store %arg8[%c2_79, %c0_80, %c0_81, %c0_82], %128 {strides = array<i32>} : memref<3x2x196x128xf32, #tpu.memory_space<vmem>>, vector<1x2x196x128xf32>,
    return
  }
  func.func @transform_0(%arg0: i32) -> (i32, i32, i32) {
    %c0_i32 = arith.constant 0 : i32
    %c0_i32_0 = arith.constant 0 : i32
    %c0_i32_1 = arith.constant 0 : i32
    return %arg0, %c0_i32, %c0_i32_0 : i32, i32, i32
  }
  func.func @transform_1(%arg0: i32) -> (i32, i32, i32) {
    %c0_i32 = arith.constant 0 : i32
    %c0_i32_0 = arith.constant 0 : i32
    %c0_i32_1 = arith.constant 0 : i32
    return %arg0, %c0_i32, %c0_i32_0 : i32, i32, i32
  }
  func.func @transform_2(%arg0: i32) -> (i32, i32, i32) {
    %c0_i32 = arith.constant 0 : i32
    %c0_i32_0 = arith.constant 0 : i32
    %c0_i32_1 = arith.constant 0 : i32
    return %arg0, %c0_i32, %c0_i32_0 : i32, i32, i32
  }
  func.func @transform_3(%arg0: i32) -> (i32, i32, i32) {
    %c0_i32 = arith.constant 0 : i32
    %c0_i32_0 = arith.constant 0 : i32
    %c0_i32_1 = arith.constant 0 : i32
    %c0_i32_2 = arith.constant 0 : i32
    return %c0_i32, %c0_i32_0, %c0_i32_1 : i32, i32, i32
  }
  func.func @transform_4(%arg0: i32) -> (i32, i32) {
    %c0_i32 = arith.constant 0 : i32
    %c0_i32_0 = arith.constant 0 : i32
    %c0_i32_1 = arith.constant 0 : i32
    return %c0_i32, %c0_i32_0 : i32, i32
  }
  func.func @transform_5(%arg0: i32) -> (i32, i32, i32) {
    %c0_i32 = arith.constant 0 : i32
    %c0_i32_0 = arith.constant 0 : i32
    %c0_i32_1 = arith.constant 0 : i32
    %c0_i32_2 = arith.constant 0 : i32
    return %c0_i32, %c0_i32_0, %c0_i32_1 : i32, i32, i32
  }
  func.func @transform_6(%arg0: i32) -> (i32, i32) {
    %c0_i32 = arith.constant 0 : i32
    %c0_i32_0 = arith.constant 0 : i32
    %c0_i32_1 = arith.constant 0 : i32
    return %c0_i32, %c0_i32_0 : i32, i32
  }
  func.func @transform_7(%arg0: i32) -> (i32, i32, i32, i32) {
    %c0_i32 = arith.constant 0 : i32
    %c0_i32_0 = arith.constant 0 : i32
    %c0_i32_1 = arith.constant 0 : i32
    %c0_i32_2 = arith.constant 0 : i32
    return %c0_i32, %arg0, %c0_i32_0, %c0_i32_1 : i32, i32, i32, i32
  }
}

</mosaic_0001>

<llo_original>
// kernel: tpu_custom_call.1
$region0: #{tpu_custom_call.1}
  #allocation0 [shape = 'u32[]', space=smem, size = 0x4, offset = 0x4, fixed_abs, tag = 'smem constant byte address 0x4 - core index']
  #allocation1 [shape = 'u32[72,128]{1,0:T(1,128)}', space=vmem, size = 0x9000, scoped, tag = 'internal scratch']
  %s0 = inlined_call_operand.vmem [shape: f32[2,196,128], index: 0, kind: input, shape index: {}]
  %s1 = inlined_call_operand.vmem [shape: f32[2,196,128], index: 1, kind: input, shape index: {}]
  %s2 = inlined_call_operand.vmem [shape: f32[2,196,128], index: 2, kind: input, shape index: {}]
  %s3 = inlined_call_operand.vmem [shape: f32[3,128,64], index: 3, kind: input, shape index: {}]
  %s4 = inlined_call_operand.vmem [shape: f32[3,64], index: 4, kind: input, shape index: {}]
  %s5 = inlined_call_operand.vmem [shape: f32[3,64,3], index: 5, kind: input, shape index: {}]
  %s6 = inlined_call_operand.vmem [shape: f32[3,3], index: 6, kind: input, shape index: {}]
  %s7 = inlined_call_operand.vmem [shape: f32[3,2,196,128], index: 7, kind: output, shape index: {}]
  %s8 = sld [smem:[#allocation0]]
  $region38: #{tpu_custom_call.1} parent=0
    _
  %s10 = ssub.s32 1, %s8
  %s11 = scalar_select 0, %s10, %s8
  // Predicated region
  $region2: #{tpu_custom_call.1} parent=0 // pred_check
    _
  $region3: #{tpu_custom_call.1} parent=0 // pred_check_branch
    %13 = sbr.rel (0) target = $region5
  $region4: #{tpu_custom_call.1} parent=0 // pred_region
    _
  $region5: #{tpu_custom_call.1} parent=0 // pred_fallthru
    _
  // Predicated region
  $region6: #{tpu_custom_call.1} parent=0 // pred_check
    _
  $region7: #{tpu_custom_call.1} parent=0 // pred_check_branch
    %15 = sbr.rel (0) target = $region9
  $region8: #{tpu_custom_call.1} parent=0 // pred_region
    _
  $region9: #{tpu_custom_call.1} parent=0 // pred_fallthru
    _
  // Predicated region
  $region10: #{tpu_custom_call.1} parent=0 // pred_check
    _
  $region11: #{tpu_custom_call.1} parent=0 // pred_check_branch
    %17 = sbr.rel (0) target = $region13
  $region12: #{tpu_custom_call.1} parent=0 // pred_region
    _
  $region13: #{tpu_custom_call.1} parent=0 // pred_fallthru
    _
  // Predicated region
  $region14: #{tpu_custom_call.1} parent=0 // pred_check
    _
  $region15: #{tpu_custom_call.1} parent=0 // pred_check_branch
    %19 = sbr.rel (0) target = $region17
  $region16: #{tpu_custom_call.1} parent=0 // pred_region
    _
  $region17: #{tpu_custom_call.1} parent=0 // pred_fallthru
    _
  // Predicated region
  $region18: #{tpu_custom_call.1} parent=0 // pred_check
    _
  $region19: #{tpu_custom_call.1} parent=0 // pred_check_branch
    %21 = sbr.rel (0) target = $region21
  $region20: #{tpu_custom_call.1} parent=0 // pred_region
    _
  $region21: #{tpu_custom_call.1} parent=0 // pred_fallthru
    _
  // Predicated region
  $region22: #{tpu_custom_call.1} parent=0 // pred_check
    _
  $region23: #{tpu_custom_call.1} parent=0 // pred_check_branch
    %23 = sbr.rel (0) target = $region25
  $region24: #{tpu_custom_call.1} parent=0 // pred_region
    _
  $region25: #{tpu_custom_call.1} parent=0 // pred_fallthru
    _
  // Predicated region
  $region26: #{tpu_custom_call.1} parent=0 // pred_check
    _
  $region27: #{tpu_custom_call.1} parent=0 // pred_check_branch
    %25 = sbr.rel (0) target = $region29
  $region28: #{tpu_custom_call.1} parent=0 // pred_region
    _
  $region29: #{tpu_custom_call.1} parent=0 // pred_fallthru
    _
  %v26 = vld [vmem:[%s0] sm:$0xff]
  %v27 = vld [vmem:[%s0 + $0x8] sm:$0xff]
  %v28 = vld [vmem:[%s0 + $0x10] sm:$0xff]
  %v29 = vld [vmem:[%s0 + $0x18] sm:$0xff]
  %v30 = vld [vmem:[%s0 + $0x20] sm:$0xff]
  %v31 = vld [vmem:[%s0 + $0x28] sm:$0xff]
  %v32 = vld [vmem:[%s0 + $0x30] sm:$0xff]
  %v33 = vld [vmem:[%s0 + $0x38] sm:$0xff]
  %v34 = vld [vmem:[%s0 + $0x40] sm:$0xff]
  %v35 = vld [vmem:[%s0 + $0x48] sm:$0xff]
  %v36 = vld [vmem:[%s0 + $0x50] sm:$0xff]
  %v37 = vld [vmem:[%s0 + $0x58] sm:$0xff]
  %v38 = vld [vmem:[%s0 + $0x60] sm:$0xff]
  %v39 = vld [vmem:[%s0 + $0x68] sm:$0xff]
  %v40 = vld [vmem:[%s0 + $0x70] sm:$0xff]
  %v41 = vld [vmem:[%s0 + $0x78] sm:$0xff]
  %v42 = vld [vmem:[%s0 + $0x80] sm:$0xff]
  %v43 = vld [vmem:[%s0 + $0x88] sm:$0xff]
  %v44 = vld [vmem:[%s0 + $0x90] sm:$0xff]
  %v45 = vld [vmem:[%s0 + $0x98] sm:$0xff]
  %v46 = vld [vmem:[%s0 + $0xa0] sm:$0xff]
  %v47 = vld [vmem:[%s0 + $0xa8] sm:$0xff]
  %v48 = vld [vmem:[%s0 + $0xb0] sm:$0xff]
  %v49 = vld [vmem:[%s0 + $0xb8] sm:$0xff]
  %v50 = vld [vmem:[%s0 + $0xc0] sm:$0xf]
  %v51 = vld [vmem:[%s0 + $0xc8] sm:$0xff]
  %v52 = vld [vmem:[%s0 + $0xd0] sm:$0xff]
  %v53 = vld [vmem:[%s0 + $0xd8] sm:$0xff]
  %v54 = vld [vmem:[%s0 + $0xe0] sm:$0xff]
  %v55 = vld [vmem:[%s0 + $0xe8] sm:$0xff]
  %v56 = vld [vmem:[%s0 + $0xf0] sm:$0xff]
  %v57 = vld [vmem:[%s0 + $0xf8] sm:$0xff]
  %v58 = vld [vmem:[%s0 + $0x100] sm:$0xff]
  %v59 = vld [vmem:[%s0 + $0x108] sm:$0xff]
  %v60 = vld [vmem:[%s0 + $0x110] sm:$0xff]
  %v61 = vld [vmem:[%s0 + $0x118] sm:$0xff]
  %v62 = vld [vmem:[%s0 + $0x120] sm:$0xff]
  %v63 = vld [vmem:[%s0 + $0x128] sm:$0xff]
  %v64 = vld [vmem:[%s0 + $0x130] sm:$0xff]
  %v65 = vld [vmem:[%s0 + $0x138] sm:$0xff]
  %v66 = vld [vmem:[%s0 + $0x140] sm:$0xff]
  %v67 = vld [vmem:[%s0 + $0x148] sm:$0xff]
  %v68 = vld [vmem:[%s0 + $0x150] sm:$0xff]
  %v69 = vld [vmem:[%s0 + $0x158] sm:$0xff]
  %v70 = vld [vmem:[%s0 + $0x160] sm:$0xff]
  %v71 = vld [vmem:[%s0 + $0x168] sm:$0xff]
  %v72 = vld [vmem:[%s0 + $0x170] sm:$0xff]
  %v73 = vld [vmem:[%s0 + $0x178] sm:$0xff]
  %v74 = vld [vmem:[%s0 + $0x180] sm:$0xff]
  %v75 = vld [vmem:[%s0 + $0x188] sm:$0xf]
  %v76 = vadd.f32 %v26, %v27
  %v77 = vadd.f32 %v76, %v28
  %v78 = vadd.f32 %v77, %v29
  %v79 = vadd.f32 %v78, %v30
  %v80 = vadd.f32 %v79, %v31
  %v81 = vadd.f32 %v80, %v32
  %v82 = vadd.f32 %v81, %v33
  %v83 = vadd.f32 %v82, %v34
  %v84 = vadd.f32 %v83, %v35
  %v85 = vadd.f32 %v84, %v36
  %v86 = vadd.f32 %v85, %v37
  %v87 = vadd.f32 %v86, %v38
  %v88 = vadd.f32 %v87, %v39
  %v89 = vadd.f32 %v88, %v40
  %v90 = vadd.f32 %v89, %v41
  %v91 = vadd.f32 %v90, %v42
  %v92 = vadd.f32 %v91, %v43
  %v93 = vadd.f32 %v92, %v44
  %v94 = vadd.f32 %v93, %v45
  %v95 = vadd.f32 %v94, %v46
  %v96 = vadd.f32 %v95, %v47
  %v97 = vadd.f32 %v96, %v48
  %v98 = vadd.f32 %v97, %v49
  %vm99 = vcmask 1043456
  %v100 = vsel %vm99, %v50, 0.0
  %v101 = vadd.f32 %v98, %v100
  %v102 = vrot.slane %v101, 4
  %v103 = vadd.f32 %v101, %v102
  %v104 = vrot.slane %v103, 2
  %v105 = vadd.f32 %v103, %v104
  %v106 = vrot.slane %v105, 1
  %v107 = vadd.f32 %v105, %v106
  %v108 = vadd.f32 %v51, %v52
  %v109 = vadd.f32 %v108, %v53
  %v110 = vadd.f32 %v109, %v54
  %v111 = vadd.f32 %v110, %v55
  %v112 = vadd.f32 %v111, %v56
  %v113 = vadd.f32 %v112, %v57
  %v114 = vadd.f32 %v113, %v58
  %v115 = vadd.f32 %v114, %v59
  %v116 = vadd.f32 %v115, %v60
  %v117 = vadd.f32 %v116, %v61
  %v118 = vadd.f32 %v117, %v62
  %v119 = vadd.f32 %v118, %v63
  %v120 = vadd.f32 %v119, %v64
  %v121 = vadd.f32 %v120, %v65
  %v122 = vadd.f32 %v121, %v66
  %v123 = vadd.f32 %v122, %v67
  %v124 = vadd.f32 %v123, %v68
  %v125 = vadd.f32 %v124, %v69
  %v126 = vadd.f32 %v125, %v70
  %v127 = vadd.f32 %v126, %v71
  %v128 = vadd.f32 %v127, %v72
  %v129 = vadd.f32 %v128, %v73
  %v130 = vadd.f32 %v129, %v74
  %v131 = vsel %vm99, %v75, 0.0
  %v132 = vadd.f32 %v130, %v131
  %v133 = vrot.slane %v132, 4
  %v134 = vadd.f32 %v132, %v133
  %v135 = vrot.slane %v134, 2
  %v136 = vadd.f32 %v134, %v135
  %v137 = vrot.slane %v136, 1
  %v138 = vadd.f32 %v136, %v137
  %v139 = vrcp.pop 196.0
  %v140 = vmul.f32 196.0, %v139
  %v141 = vsub.f32 1.0, %v140
  %v142 = vmul.f32 %v139, %v141
  %v143 = vadd.f32 %v139, %v142
  %vm144 = vweird.f32 %v139
  %v145 = vsel %vm144, %v139, %v143
  %v146 = vmul.f32 %v107, %v145
  %v147 = vmul.f32 %v138, %v145
  %v148 = vld [vmem:[%s1] sm:$0xff]
  %v149 = vld [vmem:[%s1 + $0x8] sm:$0xff]
  %v150 = vld [vmem:[%s1 + $0x10] sm:$0xff]
  %v151 = vld [vmem:[%s1 + $0x18] sm:$0xff]
  %v152 = vld [vmem:[%s1 + $0x20] sm:$0xff]
  %v153 = vld [vmem:[%s1 + $0x28] sm:$0xff]
  %v154 = vld [vmem:[%s1 + $0x30] sm:$0xff]
  %v155 = vld [vmem:[%s1 + $0x38] sm:$0xff]
  %v156 = vld [vmem:[%s1 + $0x40] sm:$0xff]
  %v157 = vld [vmem:[%s1 + $0x48] sm:$0xff]
  %v158 = vld [vmem:[%s1 + $0x50] sm:$0xff]
  %v159 = vld [vmem:[%s1 + $0x58] sm:$0xff]
  %v160 = vld [vmem:[%s1 + $0x60] sm:$0xff]
  %v161 = vld [vmem:[%s1 + $0x68] sm:$0xff]
  %v162 = vld [vmem:[%s1 + $0x70] sm:$0xff]
  %v163 = vld [vmem:[%s1 + $0x78] sm:$0xff]
  %v164 = vld [vmem:[%s1 + $0x80] sm:$0xff]
  %v165 = vld [vmem:[%s1 + $0x88] sm:$0xff]
  %v166 = vld [vmem:[%s1 + $0x90] sm:$0xff]
  %v167 = vld [vmem:[%s1 + $0x98] sm:$0xff]
  %v168 = vld [vmem:[%s1 + $0xa0] sm:$0xff]
  %v169 = vld [vmem:[%s1 + $0xa8] sm:$0xff]
  %v170 = vld [vmem:[%s1 + $0xb0] sm:$0xff]
  %v171 = vld [vmem:[%s1 + $0xb8] sm:$0xff]
  %v172 = vld [vmem:[%s1 + $0xc0] sm:$0xf]
  %v173 = vld [vmem:[%s1 + $0xc8] sm:$0xff]
  %v174 = vld [vmem:[%s1 + $0xd0] sm:$0xff]
  %v175 = vld [vmem:[%s1 + $0xd8] sm:$0xff]
  %v176 = vld [vmem:[%s1 + $0xe0] sm:$0xff]
  %v177 = vld [vmem:[%s1 + $0xe8] sm:$0xff]
  %v178 = vld [vmem:[%s1 + $0xf0] sm:$0xff]
  %v179 = vld [vmem:[%s1 + $0xf8] sm:$0xff]
  %v180 = vld [vmem:[%s1 + $0x100] sm:$0xff]
  %v181 = vld [vmem:[%s1 + $0x108] sm:$0xff]
  %v182 = vld [vmem:[%s1 + $0x110] sm:$0xff]
  %v183 = vld [vmem:[%s1 + $0x118] sm:$0xff]
  %v184 = vld [vmem:[%s1 + $0x120] sm:$0xff]
  %v185 = vld [vmem:[%s1 + $0x128] sm:$0xff]
  %v186 = vld [vmem:[%s1 + $0x130] sm:$0xff]
  %v187 = vld [vmem:[%s1 + $0x138] sm:$0xff]
  %v188 = vld [vmem:[%s1 + $0x140] sm:$0xff]
  %v189 = vld [vmem:[%s1 + $0x148] sm:$0xff]
  %v190 = vld [vmem:[%s1 + $0x150] sm:$0xff]
  %v191 = vld [vmem:[%s1 + $0x158] sm:$0xff]
  %v192 = vld [vmem:[%s1 + $0x160] sm:$0xff]
  %v193 = vld [vmem:[%s1 + $0x168] sm:$0xff]
  %v194 = vld [vmem:[%s1 + $0x170] sm:$0xff]
  %v195 = vld [vmem:[%s1 + $0x178] sm:$0xff]
  %v196 = vld [vmem:[%s1 + $0x180] sm:$0xff]
  %v197 = vld [vmem:[%s1 + $0x188] sm:$0xf]
  %v198 = vadd.f32 %v148, %v149
  %v199 = vadd.f32 %v198, %v150
  %v200 = vadd.f32 %v199, %v151
  %v201 = vadd.f32 %v200, %v152
  %v202 = vadd.f32 %v201, %v153
  %v203 = vadd.f32 %v202, %v154
  %v204 = vadd.f32 %v203, %v155
  %v205 = vadd.f32 %v204, %v156
  %v206 = vadd.f32 %v205, %v157
  %v207 = vadd.f32 %v206, %v158
  %v208 = vadd.f32 %v207, %v159
  %v209 = vadd.f32 %v208, %v160
  %v210 = vadd.f32 %v209, %v161
  %v211 = vadd.f32 %v210, %v162
  %v212 = vadd.f32 %v211, %v163
  %v213 = vadd.f32 %v212, %v164
  %v214 = vadd.f32 %v213, %v165
  %v215 = vadd.f32 %v214, %v166
  %v216 = vadd.f32 %v215, %v167
  %v217 = vadd.f32 %v216, %v168
  %v218 = vadd.f32 %v217, %v169
  %v219 = vadd.f32 %v218, %v170
  %v220 = vadd.f32 %v219, %v171
  %v221 = vsel %vm99, %v172, 0.0
  %v222 = vadd.f32 %v220, %v221
  %v223 = vrot.slane %v222, 4
  %v224 = vadd.f32 %v222, %v223
  %v225 = vrot.slane %v224, 2
  %v226 = vadd.f32 %v224, %v225
  %v227 = vrot.slane %v226, 1
  %v228 = vadd.f32 %v226, %v227
  %v229 = vadd.f32 %v173, %v174
  %v230 = vadd.f32 %v229, %v175
  %v231 = vadd.f32 %v230, %v176
  %v232 = vadd.f32 %v231, %v177
  %v233 = vadd.f32 %v232, %v178
  %v234 = vadd.f32 %v233, %v179
  %v235 = vadd.f32 %v234, %v180
  %v236 = vadd.f32 %v235, %v181
  %v237 = vadd.f32 %v236, %v182
  %v238 = vadd.f32 %v237, %v183
  %v239 = vadd.f32 %v238, %v184
  %v240 = vadd.f32 %v239, %v185
  %v241 = vadd.f32 %v240, %v186
  %v242 = vadd.f32 %v241, %v187
  %v243 = vadd.f32 %v242, %v188
  %v244 = vadd.f32 %v243, %v189
  %v245 = vadd.f32 %v244, %v190
  %v246 = vadd.f32 %v245, %v191
  %v247 = vadd.f32 %v246, %v192
  %v248 = vadd.f32 %v247, %v193
  %v249 = vadd.f32 %v248, %v194
  %v250 = vadd.f32 %v249, %v195
  %v251 = vadd.f32 %v250, %v196
  %v252 = vsel %vm99, %v197, 0.0
  %v253 = vadd.f32 %v251, %v252
  %v254 = vrot.slane %v253, 4
  %v255 = vadd.f32 %v253, %v254
  %v256 = vrot.slane %v255, 2
  %v257 = vadd.f32 %v255, %v256
  %v258 = vrot.slane %v257, 1
  %v259 = vadd.f32 %v257, %v258
  %v260 = vmul.f32 %v228, %v145
  %v261 = vmul.f32 %v259, %v145
  %v262 = vld [vmem:[%s2] sm:$0xff]
  %v263 = vld [vmem:[%s2 + $0x8] sm:$0xff]
  %v264 = vld [vmem:[%s2 + $0x10] sm:$0xff]
  %v265 = vld [vmem:[%s2 + $0x18] sm:$0xff]
  %v266 = vld [vmem:[%s2 + $0x20] sm:$0xff]
  %v267 = vld [vmem:[%s2 + $0x28] sm:$0xff]
  %v268 = vld [vmem:[%s2 + $0x30] sm:$0xff]
  %v269 = vld [vmem:[%s2 + $0x38] sm:$0xff]
  %v270 = vld [vmem:[%s2 + $0x40] sm:$0xff]
  %v271 = vld [vmem:[%s2 + $0x48] sm:$0xff]
  %v272 = vld [vmem:[%s2 + $0x50] sm:$0xff]
  %v273 = vld [vmem:[%s2 + $0x58] sm:$0xff]
  %v274 = vld [vmem:[%s2 + $0x60] sm:$0xff]
  %v275 = vld [vmem:[%s2 + $0x68] sm:$0xff]
  %v276 = vld [vmem:[%s2 + $0x70] sm:$0xff]
  %v277 = vld [vmem:[%s2 + $0x78] sm:$0xff]
  %v278 = vld [vmem:[%s2 + $0x80] sm:$0xff]
  %v279 = vld [vmem:[%s2 + $0x88] sm:$0xff]
  %v280 = vld [vmem:[%s2 + $0x90] sm:$0xff]
  %v281 = vld [vmem:[%s2 + $0x98] sm:$0xff]
  %v282 = vld [vmem:[%s2 + $0xa0] sm:$0xff]
  %v283 = vld [vmem:[%s2 + $0xa8] sm:$0xff]
  %v284 = vld [vmem:[%s2 + $0xb0] sm:$0xff]
  %v285 = vld [vmem:[%s2 + $0xb8] sm:$0xff]
  %v286 = vld [vmem:[%s2 + $0xc0] sm:$0xf]
  %v287 = vld [vmem:[%s2 + $0xc8] sm:$0xff]
  %v288 = vld [vmem:[%s2 + $0xd0] sm:$0xff]
  %v289 = vld [vmem:[%s2 + $0xd8] sm:$0xff]
  %v290 = vld [vmem:[%s2 + $0xe0] sm:$0xff]
  %v291 = vld [vmem:[%s2 + $0xe8] sm:$0xff]
  %v292 = vld [vmem:[%s2 + $0xf0] sm:$0xff]
  %v293 = vld [vmem:[%s2 + $0xf8] sm:$0xff]
  %v294 = vld [vmem:[%s2 + $0x100] sm:$0xff]
  %v295 = vld [vmem:[%s2 + $0x108] sm:$0xff]
  %v296 = vld [vmem:[%s2 + $0x110] sm:$0xff]
  %v297 = vld [vmem:[%s2 + $0x118] sm:$0xff]
  %v298 = vld [vmem:[%s2 + $0x120] sm:$0xff]
  %v299 = vld [vmem:[%s2 + $0x128] sm:$0xff]
  %v300 = vld [vmem:[%s2 + $0x130] sm:$0xff]
  %v301 = vld [vmem:[%s2 + $0x138] sm:$0xff]
  %v302 = vld [vmem:[%s2 + $0x140] sm:$0xff]
  %v303 = vld [vmem:[%s2 + $0x148] sm:$0xff]
  %v304 = vld [vmem:[%s2 + $0x150] sm:$0xff]
  %v305 = vld [vmem:[%s2 + $0x158] sm:$0xff]
  %v306 = vld [vmem:[%s2 + $0x160] sm:$0xff]
  %v307 = vld [vmem:[%s2 + $0x168] sm:$0xff]
  %v308 = vld [vmem:[%s2 + $0x170] sm:$0xff]
  %v309 = vld [vmem:[%s2 + $0x178] sm:$0xff]
  %v310 = vld [vmem:[%s2 + $0x180] sm:$0xff]
  %v311 = vld [vmem:[%s2 + $0x188] sm:$0xf]
  %v312 = vadd.f32 %v262, %v263
  %v313 = vadd.f32 %v312, %v264
  %v314 = vadd.f32 %v313, %v265
  %v315 = vadd.f32 %v314, %v266
  %v316 = vadd.f32 %v315, %v267
  %v317 = vadd.f32 %v316, %v268
  %v318 = vadd.f32 %v317, %v269
  %v319 = vadd.f32 %v318, %v270
  %v320 = vadd.f32 %v319, %v271
  %v321 = vadd.f32 %v320, %v272
  %v322 = vadd.f32 %v321, %v273
  %v323 = vadd.f32 %v322, %v274
  %v324 = vadd.f32 %v323, %v275
  %v325 = vadd.f32 %v324, %v276
  %v326 = vadd.f32 %v325, %v277
  %v327 = vadd.f32 %v326, %v278
  %v328 = vadd.f32 %v327, %v279
  %v329 = vadd.f32 %v328, %v280
  %v330 = vadd.f32 %v329, %v281
  %v331 = vadd.f32 %v330, %v282
  %v332 = vadd.f32 %v331, %v283
  %v333 = vadd.f32 %v332, %v284
  %v334 = vadd.f32 %v333, %v285
  %v335 = vsel %vm99, %v286, 0.0
  %v336 = vadd.f32 %v334, %v335
  %v337 = vrot.slane %v336, 4
  %v338 = vadd.f32 %v336, %v337
  %v339 = vrot.slane %v338, 2
  %v340 = vadd.f32 %v338, %v339
  %v341 = vrot.slane %v340, 1
  %v342 = vadd.f32 %v340, %v341
  %v343 = vadd.f32 %v287, %v288
  %v344 = vadd.f32 %v343, %v289
  %v345 = vadd.f32 %v344, %v290
  %v346 = vadd.f32 %v345, %v291
  %v347 = vadd.f32 %v346, %v292
  %v348 = vadd.f32 %v347, %v293
  %v349 = vadd.f32 %v348, %v294
  %v350 = vadd.f32 %v349, %v295
  %v351 = vadd.f32 %v350, %v296
  %v352 = vadd.f32 %v351, %v297
  %v353 = vadd.f32 %v352, %v298
  %v354 = vadd.f32 %v353, %v299
  %v355 = vadd.f32 %v354, %v300
  %v356 = vadd.f32 %v355, %v301
  %v357 = vadd.f32 %v356, %v302
  %v358 = vadd.f32 %v357, %v303
  %v359 = vadd.f32 %v358, %v304
  %v360 = vadd.f32 %v359, %v305
  %v361 = vadd.f32 %v360, %v306
  %v362 = vadd.f32 %v361, %v307
  %v363 = vadd.f32 %v362, %v308
  %v364 = vadd.f32 %v363, %v309
  %v365 = vadd.f32 %v364, %v310
  %v366 = vsel %vm99, %v311, 0.0
  %v367 = vadd.f32 %v365, %v366
  %v368 = vrot.slane %v367, 4
  %v369 = vadd.f32 %v367, %v368
  %v370 = vrot.slane %v369, 2
  %v371 = vadd.f32 %v369, %v370
  %v372 = vrot.slane %v371, 1
  %v373 = vadd.f32 %v371, %v372
  %v374 = vmul.f32 %v342, %v145
  %v375 = vmul.f32 %v373, %v145
  %v376 = vld [vmem:[%s3] sm:$0xff]
  %v377 = vld [vmem:[%s3 + $0x8] sm:$0xff]
  %v378 = vld [vmem:[%s3 + $0x10] sm:$0xff]
  %v379 = vld [vmem:[%s3 + $0x18] sm:$0xff]
  %v380 = vld [vmem:[%s3 + $0x20] sm:$0xff]
  %v381 = vld [vmem:[%s3 + $0x28] sm:$0xff]
  %v382 = vld [vmem:[%s3 + $0x30] sm:$0xff]
  %v383 = vld [vmem:[%s3 + $0x38] sm:$0xff]
  %v384 = vld [vmem:[%s3 + $0x40] sm:$0xff]
  %v385 = vld [vmem:[%s3 + $0x48] sm:$0xff]
  %v386 = vld [vmem:[%s3 + $0x50] sm:$0xff]
  %v387 = vld [vmem:[%s3 + $0x58] sm:$0xff]
  %v388 = vld [vmem:[%s3 + $0x60] sm:$0xff]
  %v389 = vld [vmem:[%s3 + $0x68] sm:$0xff]
  %v390 = vld [vmem:[%s3 + $0x70] sm:$0xff]
  %v391 = vld [vmem:[%s3 + $0x78] sm:$0xff]
  %v392 = vld [vmem:[%s4] sm:$0x1]
  %v393 = vperm.slane %v392, 0
  %vm396 = vcmask 1041409
  %v397 = vsel %vm396, %v147, %v146
  %399 = vmatpush.msra.mxu0 %v391
  %400 = vmatpush.msra.mxu0 %v390
  %401 = vmatpush.msra.mxu0 %v389
  %402 = vmatpush.msra.mxu0 %v388
  %403 = vmatpush.msra.mxu0 %v387
  %404 = vmatpush.msra.mxu0 %v386
  %405 = vmatpush.msra.mxu0 %v385
  %406 = vmatpush.msra.mxu0 %v384
  %407 = vmatpush.msra.mxu0 %v383
  %408 = vmatpush.msra.mxu0 %v382
  %409 = vmatpush.msra.mxu0 %v381
  %410 = vmatpush.msra.mxu0 %v380
  %411 = vmatpush.msra.mxu0 %v379
  %412 = vmatpush.msra.mxu0 %v378
  %413 = vmatpush.msra.mxu0 %v377
  %414 = vmatpush.msra.mxu0 %v376
  %415 = vmatmul.f32.gmra.mxu0 %v397
  %v416 = vpop.f32.mrf.mxu0
  %v417 = vadd.f32 %v393, %v416
  %418 = vdwg.mxu0
  %vm419 = vcmp.gt.f32.partialorder %v417, 0.0
  %v420 = vmul.f32 %v417, 0.01
  %v421 = vsel %vm419, %v417, %v420
  %v422 = vld [vmem:[%s5] sm:$0xff]
  %v423 = vld [vmem:[%s5 + $0x8] sm:$0xff]
  %v424 = vld [vmem:[%s5 + $0x10] sm:$0xff]
  %v425 = vld [vmem:[%s5 + $0x18] sm:$0xff]
  %v426 = vld [vmem:[%s5 + $0x20] sm:$0xff]
  %v427 = vld [vmem:[%s5 + $0x28] sm:$0xff]
  %v428 = vld [vmem:[%s5 + $0x30] sm:$0xff]
  %v429 = vld [vmem:[%s5 + $0x38] sm:$0xff]
  %v430 = vld [vmem:[%s6] sm:$0x1]
  %v431 = vperm.slane %v430, 0
  %vm432 = vcmask 523264
  %v434 = vsel %vm432, %v421, 0
  %436 = vmatpush.msra.mxu0 0.0
  %437 = vmatpush.msra.mxu0 0.0
  %438 = vmatpush.msra.mxu0 0.0
  %439 = vmatpush.msra.mxu0 0.0
  %440 = vmatpush.msra.mxu0 0.0
  %441 = vmatpush.msra.mxu0 0.0
  %442 = vmatpush.msra.mxu0 0.0
  %443 = vmatpush.msra.mxu0 0.0
  %444 = vmatpush.msra.mxu0 %v429
  %445 = vmatpush.msra.mxu0 %v428
  %446 = vmatpush.msra.mxu0 %v427
  %447 = vmatpush.msra.mxu0 %v426
  %448 = vmatpush.msra.mxu0 %v425
  %449 = vmatpush.msra.mxu0 %v424
  %450 = vmatpush.msra.mxu0 %v423
  %451 = vmatpush.msra.mxu0 %v422
  %452 = vmatmul.f32.gmra.mxu0 %v434
  %v453 = vpop.f32.mrf.mxu0
  %v454 = vadd.f32 %v431, %v453
  %455 = vdwg.mxu0
  %s456 = scalar_lea.vmem %s3, 128
  %v457 = vld [vmem:[%s456] sm:$0xff]
  %v458 = vld [vmem:[%s456 + $0x8] sm:$0xff]
  %v459 = vld [vmem:[%s456 + $0x10] sm:$0xff]
  %v460 = vld [vmem:[%s456 + $0x18] sm:$0xff]
  %v461 = vld [vmem:[%s456 + $0x20] sm:$0xff]
  %v462 = vld [vmem:[%s456 + $0x28] sm:$0xff]
  %v463 = vld [vmem:[%s456 + $0x30] sm:$0xff]
  %v464 = vld [vmem:[%s456 + $0x38] sm:$0xff]
  %v465 = vld [vmem:[%s456 + $0x40] sm:$0xff]
  %v466 = vld [vmem:[%s456 + $0x48] sm:$0xff]
  %v467 = vld [vmem:[%s456 + $0x50] sm:$0xff]
  %v468 = vld [vmem:[%s456 + $0x58] sm:$0xff]
  %v469 = vld [vmem:[%s456 + $0x60] sm:$0xff]
  %v470 = vld [vmem:[%s456 + $0x68] sm:$0xff]
  %v471 = vld [vmem:[%s456 + $0x70] sm:$0xff]
  %v472 = vld [vmem:[%s456 + $0x78] sm:$0xff]
  %v473 = vld [vmem:[%s4 + $0x1] sm:$0x1]
  %v474 = vperm.slane %v473, 0
  %v477 = vsel %vm396, %v261, %v260
  %479 = vmatpush.msra.mxu0 %v472
  %480 = vmatpush.msra.mxu0 %v471
  %481 = vmatpush.msra.mxu0 %v470
  %482 = vmatpush.msra.mxu0 %v469
  %483 = vmatpush.msra.mxu0 %v468
  %484 = vmatpush.msra.mxu0 %v467
  %485 = vmatpush.msra.mxu0 %v466
  %486 = vmatpush.msra.mxu0 %v465
  %487 = vmatpush.msra.mxu0 %v464
  %488 = vmatpush.msra.mxu0 %v463
  %489 = vmatpush.msra.mxu0 %v462
  %490 = vmatpush.msra.mxu0 %v461
  %491 = vmatpush.msra.mxu0 %v460
  %492 = vmatpush.msra.mxu0 %v459
  %493 = vmatpush.msra.mxu0 %v458
  %494 = vmatpush.msra.mxu0 %v457
  %495 = vmatmul.f32.gmra.mxu0 %v477
  %v496 = vpop.f32.mrf.mxu0
  %v497 = vadd.f32 %v474, %v496
  %498 = vdwg.mxu0
  %vm499 = vcmp.gt.f32.partialorder %v497, 0.0
  %v500 = vmul.f32 %v497, 0.01
  %v501 = vsel %vm499, %v497, %v500
  %s502 = scalar_lea.vmem %s5, 64
  %v503 = vld [vmem:[%s502] sm:$0xff]
  %v504 = vld [vmem:[%s502 + $0x8] sm:$0xff]
  %v505 = vld [vmem:[%s502 + $0x10] sm:$0xff]
  %v506 = vld [vmem:[%s502 + $0x18] sm:$0xff]
  %v507 = vld [vmem:[%s502 + $0x20] sm:$0xff]
  %v508 = vld [vmem:[%s502 + $0x28] sm:$0xff]
  %v509 = vld [vmem:[%s502 + $0x30] sm:$0xff]
  %v510 = vld [vmem:[%s502 + $0x38] sm:$0xff]
  %v511 = vld [vmem:[%s6 + $0x1] sm:$0x1]
  %v512 = vperm.slane %v511, 0
  %v514 = vsel %vm432, %v501, 0
  %516 = vmatpush.msra.mxu0 0.0
  %517 = vmatpush.msra.mxu0 0.0
  %518 = vmatpush.msra.mxu0 0.0
  %519 = vmatpush.msra.mxu0 0.0
  %520 = vmatpush.msra.mxu0 0.0
  %521 = vmatpush.msra.mxu0 0.0
  %522 = vmatpush.msra.mxu0 0.0
  %523 = vmatpush.msra.mxu0 0.0
  %524 = vmatpush.msra.mxu0 %v510
  %525 = vmatpush.msra.mxu0 %v509
  %526 = vmatpush.msra.mxu0 %v508
  %527 = vmatpush.msra.mxu0 %v507
  %528 = vmatpush.msra.mxu0 %v506
  %529 = vmatpush.msra.mxu0 %v505
  %530 = vmatpush.msra.mxu0 %v504
  %531 = vmatpush.msra.mxu0 %v503
  %532 = vmatmul.f32.gmra.mxu0 %v514
  %v533 = vpop.f32.mrf.mxu0
  %v534 = vadd.f32 %v512, %v533
  %535 = vdwg.mxu0
  %s536 = scalar_lea.vmem %s3, 256
  %v537 = vld [vmem:[%s536] sm:$0xff]
  %v538 = vld [vmem:[%s536 + $0x8] sm:$0xff]
  %v539 = vld [vmem:[%s536 + $0x10] sm:$0xff]
  %v540 = vld [vmem:[%s536 + $0x18] sm:$0xff]
  %v541 = vld [vmem:[%s536 + $0x20] sm:$0xff]
  %v542 = vld [vmem:[%s536 + $0x28] sm:$0xff]
  %v543 = vld [vmem:[%s536 + $0x30] sm:$0xff]
  %v544 = vld [vmem:[%s536 + $0x38] sm:$0xff]
  %v545 = vld [vmem:[%s536 + $0x40] sm:$0xff]
  %v546 = vld [vmem:[%s536 + $0x48] sm:$0xff]
  %v547 = vld [vmem:[%s536 + $0x50] sm:$0xff]
  %v548 = vld [vmem:[%s536 + $0x58] sm:$0xff]
  %v549 = vld [vmem:[%s536 + $0x60] sm:$0xff]
  %v550 = vld [vmem:[%s536 + $0x68] sm:$0xff]
  %v551 = vld [vmem:[%s536 + $0x70] sm:$0xff]
  %v552 = vld [vmem:[%s536 + $0x78] sm:$0xff]
  %v553 = vld [vmem:[%s4 + $0x2] sm:$0x1]
  %v554 = vperm.slane %v553, 0
  %v557 = vsel %vm396, %v375, %v374
  %559 = vmatpush.msra.mxu0 %v552
  %560 = vmatpush.msra.mxu0 %v551
  %561 = vmatpush.msra.mxu0 %v550
  %562 = vmatpush.msra.mxu0 %v549
  %563 = vmatpush.msra.mxu0 %v548
  %564 = vmatpush.msra.mxu0 %v547
  %565 = vmatpush.msra.mxu0 %v546
  %566 = vmatpush.msra.mxu0 %v545
  %567 = vmatpush.msra.mxu0 %v544
  %568 = vmatpush.msra.mxu0 %v543
  %569 = vmatpush.msra.mxu0 %v542
  %570 = vmatpush.msra.mxu0 %v541
  %571 = vmatpush.msra.mxu0 %v540
  %572 = vmatpush.msra.mxu0 %v539
  %573 = vmatpush.msra.mxu0 %v538
  %574 = vmatpush.msra.mxu0 %v537
  %575 = vmatmul.f32.gmra.mxu0 %v557
  %v576 = vpop.f32.mrf.mxu0
  %v577 = vadd.f32 %v554, %v576
  %578 = vdwg.mxu0
  %vm579 = vcmp.gt.f32.partialorder %v577, 0.0
  %v580 = vmul.f32 %v577, 0.01
  %v581 = vsel %vm579, %v577, %v580
  %s582 = scalar_lea.vmem %s5, 128
  %v583 = vld [vmem:[%s582] sm:$0xff]
  %v584 = vld [vmem:[%s582 + $0x8] sm:$0xff]
  %v585 = vld [vmem:[%s582 + $0x10] sm:$0xff]
  %v586 = vld [vmem:[%s582 + $0x18] sm:$0xff]
  %v587 = vld [vmem:[%s582 + $0x20] sm:$0xff]
  %v588 = vld [vmem:[%s582 + $0x28] sm:$0xff]
  %v589 = vld [vmem:[%s582 + $0x30] sm:$0xff]
  %v590 = vld [vmem:[%s582 + $0x38] sm:$0xff]
  %v591 = vld [vmem:[%s6 + $0x2] sm:$0x1]
  %v592 = vperm.slane %v591, 0
  %v594 = vsel %vm432, %v581, 0
  %596 = vmatpush.msra.mxu0 0.0
  %597 = vmatpush.msra.mxu0 0.0
  %598 = vmatpush.msra.mxu0 0.0
  %599 = vmatpush.msra.mxu0 0.0
  %600 = vmatpush.msra.mxu0 0.0
  %601 = vmatpush.msra.mxu0 0.0
  %602 = vmatpush.msra.mxu0 0.0
  %603 = vmatpush.msra.mxu0 0.0
  %604 = vmatpush.msra.mxu0 %v590
  %605 = vmatpush.msra.mxu0 %v589
  %606 = vmatpush.msra.mxu0 %v588
  %607 = vmatpush.msra.mxu0 %v587
  %608 = vmatpush.msra.mxu0 %v586
  %609 = vmatpush.msra.mxu0 %v585
  %610 = vmatpush.msra.mxu0 %v584
  %611 = vmatpush.msra.mxu0 %v583
  %612 = vmatmul.f32.gmra.mxu0 %v594
  %v613 = vpop.f32.mrf.mxu0
  %v614 = vadd.f32 %v592, %v613
  %615 = vdwg.mxu0
  %v617 = vrot.slane %v454, 1
  %v618 = vperm.slane %v454, 0
  %v619 = vperm.slane %v617, 0
  %620 = vset.pattern.permute.xlu0 0
  %621 = vperm.xlu0 %620, %v618
  %v622 = vpop.permute.xlu0 %621
  %624 = vset.pattern.permute.xlu0 0
  %625 = vperm.xlu0 %624, %v619
  %v626 = vpop.permute.xlu0 %625
  %v628 = vmul.f32 %v148, %v622
  %v629 = vmul.f32 %v149, %v622
  %v630 = vmul.f32 %v150, %v622
  %v631 = vmul.f32 %v151, %v622
  %v632 = vmul.f32 %v152, %v622
  %v633 = vmul.f32 %v153, %v622
  %v634 = vmul.f32 %v154, %v622
  %v635 = vmul.f32 %v155, %v622
  %v636 = vmul.f32 %v156, %v622
  %v637 = vmul.f32 %v157, %v622
  %v638 = vmul.f32 %v158, %v622
  %v639 = vmul.f32 %v159, %v622
  %v640 = vmul.f32 %v160, %v622
  %v641 = vmul.f32 %v161, %v622
  %v642 = vmul.f32 %v162, %v622
  %v643 = vmul.f32 %v163, %v622
  %v644 = vmul.f32 %v164, %v622
  %v645 = vmul.f32 %v165, %v622
  %v646 = vmul.f32 %v166, %v622
  %v647 = vmul.f32 %v167, %v622
  %v648 = vmul.f32 %v168, %v622
  %v649 = vmul.f32 %v169, %v622
  %v650 = vmul.f32 %v170, %v622
  %v651 = vmul.f32 %v171, %v622
  %v652 = vmul.f32 %v172, %v622
  %v653 = vmul.f32 %v173, %v626
  %v654 = vmul.f32 %v174, %v626
  %v655 = vmul.f32 %v175, %v626
  %v656 = vmul.f32 %v176, %v626
  %v657 = vmul.f32 %v177, %v626
  %v658 = vmul.f32 %v178, %v626
  %v659 = vmul.f32 %v179, %v626
  %v660 = vmul.f32 %v180, %v626
  %v661 = vmul.f32 %v181, %v626
  %v662 = vmul.f32 %v182, %v626
  %v663 = vmul.f32 %v183, %v626
  %v664 = vmul.f32 %v184, %v626
  %v665 = vmul.f32 %v185, %v626
  %v666 = vmul.f32 %v186, %v626
  %v667 = vmul.f32 %v187, %v626
  %v668 = vmul.f32 %v188, %v626
  %v669 = vmul.f32 %v189, %v626
  %v670 = vmul.f32 %v190, %v626
  %v671 = vmul.f32 %v191, %v626
  %v672 = vmul.f32 %v192, %v626
  %v673 = vmul.f32 %v193, %v626
  %v674 = vmul.f32 %v194, %v626
  %v675 = vmul.f32 %v195, %v626
  %v676 = vmul.f32 %v196, %v626
  %v677 = vmul.f32 %v197, %v626
  %678 = vset.pattern.permute.xlu0 1
  %679 = vperm.xlu0 %678, %v618
  %v680 = vpop.permute.xlu0 %679
  %682 = vset.pattern.permute.xlu0 1
  %683 = vperm.xlu0 %682, %v619
  %v684 = vpop.permute.xlu0 %683
  %v686 = vmul.f32 %v262, %v680
  %v687 = vmul.f32 %v263, %v680
  %v688 = vmul.f32 %v264, %v680
  %v689 = vmul.f32 %v265, %v680
  %v690 = vmul.f32 %v266, %v680
  %v691 = vmul.f32 %v267, %v680
  %v692 = vmul.f32 %v268, %v680
  %v693 = vmul.f32 %v269, %v680
  %v694 = vmul.f32 %v270, %v680
  %v695 = vmul.f32 %v271, %v680
  %v696 = vmul.f32 %v272, %v680
  %v697 = vmul.f32 %v273, %v680
  %v698 = vmul.f32 %v274, %v680
  %v699 = vmul.f32 %v275, %v680
  %v700 = vmul.f32 %v276, %v680
  %v701 = vmul.f32 %v277, %v680
  %v702 = vmul.f32 %v278, %v680
  %v703 = vmul.f32 %v279, %v680
  %v704 = vmul.f32 %v280, %v680
  %v705 = vmul.f32 %v281, %v680
  %v706 = vmul.f32 %v282, %v680
  %v707 = vmul.f32 %v283, %v680
  %v708 = vmul.f32 %v284, %v680
  %v709 = vmul.f32 %v285, %v680
  %v710 = vmul.f32 %v286, %v680
  %v711 = vmul.f32 %v287, %v684
  %v712 = vmul.f32 %v288, %v684
  %v713 = vmul.f32 %v289, %v684
  %v714 = vmul.f32 %v290, %v684
  %v715 = vmul.f32 %v291, %v684
  %v716 = vmul.f32 %v292, %v684
  %v717 = vmul.f32 %v293, %v684
  %v718 = vmul.f32 %v294, %v684
  %v719 = vmul.f32 %v295, %v684
  %v720 = vmul.f32 %v296, %v684
  %v721 = vmul.f32 %v297, %v684
  %v722 = vmul.f32 %v298, %v684
  %v723 = vmul.f32 %v299, %v684
  %v724 = vmul.f32 %v300, %v684
  %v725 = vmul.f32 %v301, %v684
  %v726 = vmul.f32 %v302, %v684
  %v727 = vmul.f32 %v303, %v684
  %v728 = vmul.f32 %v304, %v684
  %v729 = vmul.f32 %v305, %v684
  %v730 = vmul.f32 %v306, %v684
  %v731 = vmul.f32 %v307, %v684
  %v732 = vmul.f32 %v308, %v684
  %v733 = vmul.f32 %v309, %v684
  %v734 = vmul.f32 %v310, %v684
  %v735 = vmul.f32 %v311, %v684
  %v736 = vadd.f32 %v628, %v686
  %v737 = vadd.f32 %v629, %v687
  %v738 = vadd.f32 %v630, %v688
  %v739 = vadd.f32 %v631, %v689
  %v740 = vadd.f32 %v632, %v690
  %v741 = vadd.f32 %v633, %v691
  %v742 = vadd.f32 %v634, %v692
  %v743 = vadd.f32 %v635, %v693
  %v744 = vadd.f32 %v636, %v694
  %v745 = vadd.f32 %v637, %v695
  %v746 = vadd.f32 %v638, %v696
  %v747 = vadd.f32 %v639, %v697
  %v748 = vadd.f32 %v640, %v698
  %v749 = vadd.f32 %v641, %v699
  %v750 = vadd.f32 %v642, %v700
  %v751 = vadd.f32 %v643, %v701
  %v752 = vadd.f32 %v644, %v702
  %v753 = vadd.f32 %v645, %v703
  %v754 = vadd.f32 %v646, %v704
  %v755 = vadd.f32 %v647, %v705
  %v756 = vadd.f32 %v648, %v706
  %v757 = vadd.f32 %v649, %v707
  %v758 = vadd.f32 %v650, %v708
  %v759 = vadd.f32 %v651, %v709
  %v760 = vadd.f32 %v652, %v710
  %v761 = vadd.f32 %v653, %v711
  %v762 = vadd.f32 %v654, %v712
  %v763 = vadd.f32 %v655, %v713
  %v764 = vadd.f32 %v656, %v714
  %v765 = vadd.f32 %v657, %v715
  %v766 = vadd.f32 %v658, %v716
  %v767 = vadd.f32 %v659, %v717
  %v768 = vadd.f32 %v660, %v718
  %v769 = vadd.f32 %v661, %v719
  %v770 = vadd.f32 %v662, %v720
  %v771 = vadd.f32 %v663, %v721
  %v772 = vadd.f32 %v664, %v722
  %v773 = vadd.f32 %v665, %v723
  %v774 = vadd.f32 %v666, %v724
  %v775 = vadd.f32 %v667, %v725
  %v776 = vadd.f32 %v668, %v726
  %v777 = vadd.f32 %v669, %v727
  %v778 = vadd.f32 %v670, %v728
  %v779 = vadd.f32 %v671, %v729
  %v780 = vadd.f32 %v672, %v730
  %v781 = vadd.f32 %v673, %v731
  %v782 = vadd.f32 %v674, %v732
  %v783 = vadd.f32 %v675, %v733
  %v784 = vadd.f32 %v676, %v734
  %v785 = vadd.f32 %v677, %v735
  %786 = vset.pattern.permute.xlu0 2
  %787 = vperm.xlu0 %786, %v618
  %v788 = vpop.permute.xlu0 %787
  %790 = vset.pattern.permute.xlu0 2
  %791 = vperm.xlu0 %790, %v619
  %v792 = vpop.permute.xlu0 %791
  %v794 = vadd.f32 %v736, %v788
  %v795 = vadd.f32 %v737, %v788
  %v796 = vadd.f32 %v738, %v788
  %v797 = vadd.f32 %v739, %v788
  %v798 = vadd.f32 %v740, %v788
  %v799 = vadd.f32 %v741, %v788
  %v800 = vadd.f32 %v742, %v788
  %v801 = vadd.f32 %v743, %v788
  %v802 = vadd.f32 %v744, %v788
  %v803 = vadd.f32 %v745, %v788
  %v804 = vadd.f32 %v746, %v788
  %v805 = vadd.f32 %v747, %v788
  %v806 = vadd.f32 %v748, %v788
  %v807 = vadd.f32 %v749, %v788
  %v808 = vadd.f32 %v750, %v788
  %v809 = vadd.f32 %v751, %v788
  %v810 = vadd.f32 %v752, %v788
  %v811 = vadd.f32 %v753, %v788
  %v812 = vadd.f32 %v754, %v788
  %v813 = vadd.f32 %v755, %v788
  %v814 = vadd.f32 %v756, %v788
  %v815 = vadd.f32 %v757, %v788
  %v816 = vadd.f32 %v758, %v788
  %v817 = vadd.f32 %v759, %v788
  %v818 = vadd.f32 %v760, %v788
  %v819 = vadd.f32 %v761, %v792
  %v820 = vadd.f32 %v762, %v792
  %v821 = vadd.f32 %v763, %v792
  %v822 = vadd.f32 %v764, %v792
  %v823 = vadd.f32 %v765, %v792
  %v824 = vadd.f32 %v766, %v792
  %v825 = vadd.f32 %v767, %v792
  %v826 = vadd.f32 %v768, %v792
  %v827 = vadd.f32 %v769, %v792
  %v828 = vadd.f32 %v770, %v792
  %v829 = vadd.f32 %v771, %v792
  %v830 = vadd.f32 %v772, %v792
  %v831 = vadd.f32 %v773, %v792
  %v832 = vadd.f32 %v774, %v792
  %v833 = vadd.f32 %v775, %v792
  %v834 = vadd.f32 %v776, %v792
  %v835 = vadd.f32 %v777, %v792
  %v836 = vadd.f32 %v778, %v792
  %v837 = vadd.f32 %v779, %v792
  %v838 = vadd.f32 %v780, %v792
  %v839 = vadd.f32 %v781, %v792
  %v840 = vadd.f32 %v782, %v792
  %v841 = vadd.f32 %v783, %v792
  %v842 = vadd.f32 %v784, %v792
  %v843 = vadd.f32 %v785, %v792
  %844 = vst [vmem:[%s7] sm:$0xff] %v794
  %845 = vst [vmem:[%s7 + $0x8] sm:$0xff] %v795
  %846 = vst [vmem:[%s7 + $0x10] sm:$0xff] %v796
  %847 = vst [vmem:[%s7 + $0x18] sm:$0xff] %v797
  %848 = vst [vmem:[%s7 + $0x20] sm:$0xff] %v798
  %849 = vst [vmem:[%s7 + $0x28] sm:$0xff] %v799
  %850 = vst [vmem:[%s7 + $0x30] sm:$0xff] %v800
  %851 = vst [vmem:[%s7 + $0x38] sm:$0xff] %v801
  %852 = vst [vmem:[%s7 + $0x40] sm:$0xff] %v802
  %853 = vst [vmem:[%s7 + $0x48] sm:$0xff] %v803
  %854 = vst [vmem:[%s7 + $0x50] sm:$0xff] %v804
  %855 = vst [vmem:[%s7 + $0x58] sm:$0xff] %v805
  %856 = vst [vmem:[%s7 + $0x60] sm:$0xff] %v806
  %857 = vst [vmem:[%s7 + $0x68] sm:$0xff] %v807
  %858 = vst [vmem:[%s7 + $0x70] sm:$0xff] %v808
  %859 = vst [vmem:[%s7 + $0x78] sm:$0xff] %v809
  %860 = vst [vmem:[%s7 + $0x80] sm:$0xff] %v810
  %861 = vst [vmem:[%s7 + $0x88] sm:$0xff] %v811
  %862 = vst [vmem:[%s7 + $0x90] sm:$0xff] %v812
  %863 = vst [vmem:[%s7 + $0x98] sm:$0xff] %v813
  %864 = vst [vmem:[%s7 + $0xa0] sm:$0xff] %v814
  %865 = vst [vmem:[%s7 + $0xa8] sm:$0xff] %v815
  %866 = vst [vmem:[%s7 + $0xb0] sm:$0xff] %v816
  %867 = vst [vmem:[%s7 + $0xb8] sm:$0xff] %v817
  %868 = vst [vmem:[%s7 + $0xc0] sm:$0xf] %v818
  %869 = vst [vmem:[%s7 + $0xc8] sm:$0xff] %v819
  %870 = vst [vmem:[%s7 + $0xd0] sm:$0xff] %v820
  %871 = vst [vmem:[%s7 + $0xd8] sm:$0xff] %v821
  %872 = vst [vmem:[%s7 + $0xe0] sm:$0xff] %v822
  %873 = vst [vmem:[%s7 + $0xe8] sm:$0xff] %v823
  %874 = vst [vmem:[%s7 + $0xf0] sm:$0xff] %v824
  %875 = vst [vmem:[%s7 + $0xf8] sm:$0xff] %v825
  %876 = vst [vmem:[%s7 + $0x100] sm:$0xff] %v826
  %877 = vst [vmem:[%s7 + $0x108] sm:$0xff] %v827
  %878 = vst [vmem:[%s7 + $0x110] sm:$0xff] %v828
  %879 = vst [vmem:[%s7 + $0x118] sm:$0xff] %v829
  %880 = vst [vmem:[%s7 + $0x120] sm:$0xff] %v830
  %881 = vst [vmem:[%s7 + $0x128] sm:$0xff] %v831
  %882 = vst [vmem:[%s7 + $0x130] sm:$0xff] %v832
  %883 = vst [vmem:[%s7 + $0x138] sm:$0xff] %v833
  %884 = vst [vmem:[%s7 + $0x140] sm:$0xff] %v834
  %885 = vst [vmem:[%s7 + $0x148] sm:$0xff] %v835
  %886 = vst [vmem:[%s7 + $0x150] sm:$0xff] %v836
  %887 = vst [vmem:[%s7 + $0x158] sm:$0xff] %v837
  %888 = vst [vmem:[%s7 + $0x160] sm:$0xff] %v838
  %889 = vst [vmem:[%s7 + $0x168] sm:$0xff] %v839
  %890 = vst [vmem:[%s7 + $0x170] sm:$0xff] %v840
  %891 = vst [vmem:[%s7 + $0x178] sm:$0xff] %v841
  %892 = vst [vmem:[%s7 + $0x180] sm:$0xff] %v842
  %893 = vst [vmem:[%s7 + $0x188] sm:$0xf] %v843
  %v894 = vld [vmem:[%s0] sm:$0xff]
  %v895 = vld [vmem:[%s0 + $0x8] sm:$0xff]
  %v896 = vld [vmem:[%s0 + $0x10] sm:$0xff]
  %v897 = vld [vmem:[%s0 + $0x18] sm:$0xff]
  %v898 = vld [vmem:[%s0 + $0x20] sm:$0xff]
  %v899 = vld [vmem:[%s0 + $0x28] sm:$0xff]
  %v900 = vld [vmem:[%s0 + $0x30] sm:$0xff]
  %v901 = vld [vmem:[%s0 + $0x38] sm:$0xff]
  %v902 = vld [vmem:[%s0 + $0x40] sm:$0xff]
  %v903 = vld [vmem:[%s0 + $0x48] sm:$0xff]
  %v904 = vld [vmem:[%s0 + $0x50] sm:$0xff]
  %v905 = vld [vmem:[%s0 + $0x58] sm:$0xff]
  %v906 = vld [vmem:[%s0 + $0x60] sm:$0xff]
  %v907 = vld [vmem:[%s0 + $0x68] sm:$0xff]
  %v908 = vld [vmem:[%s0 + $0x70] sm:$0xff]
  %v909 = vld [vmem:[%s0 + $0x78] sm:$0xff]
  %v910 = vld [vmem:[%s0 + $0x80] sm:$0xff]
  %v911 = vld [vmem:[%s0 + $0x88] sm:$0xff]
  %v912 = vld [vmem:[%s0 + $0x90] sm:$0xff]
  %v913 = vld [vmem:[%s0 + $0x98] sm:$0xff]
  %v914 = vld [vmem:[%s0 + $0xa0] sm:$0xff]
  %v915 = vld [vmem:[%s0 + $0xa8] sm:$0xff]
  %v916 = vld [vmem:[%s0 + $0xb0] sm:$0xff]
  %v917 = vld [vmem:[%s0 + $0xb8] sm:$0xff]
  %v918 = vld [vmem:[%s0 + $0xc0] sm:$0xf]
  %v919 = vld [vmem:[%s0 + $0xc8] sm:$0xff]
  %v920 = vld [vmem:[%s0 + $0xd0] sm:$0xff]
  %v921 = vld [vmem:[%s0 + $0xd8] sm:$0xff]
  %v922 = vld [vmem:[%s0 + $0xe0] sm:$0xff]
  %v923 = vld [vmem:[%s0 + $0xe8] sm:$0xff]
  %v924 = vld [vmem:[%s0 + $0xf0] sm:$0xff]
  %v925 = vld [vmem:[%s0 + $0xf8] sm:$0xff]
  %v926 = vld [vmem:[%s0 + $0x100] sm:$0xff]
  %v927 = vld [vmem:[%s0 + $0x108] sm:$0xff]
  %v928 = vld [vmem:[%s0 + $0x110] sm:$0xff]
  %v929 = vld [vmem:[%s0 + $0x118] sm:$0xff]
  %v930 = vld [vmem:[%s0 + $0x120] sm:$0xff]
  %v931 = vld [vmem:[%s0 + $0x128] sm:$0xff]
  %v932 = vld [vmem:[%s0 + $0x130] sm:$0xff]
  %v933 = vld [vmem:[%s0 + $0x138] sm:$0xff]
  %v934 = vld [vmem:[%s0 + $0x140] sm:$0xff]
  %v935 = vld [vmem:[%s0 + $0x148] sm:$0xff]
  %v936 = vld [vmem:[%s0 + $0x150] sm:$0xff]
  %v937 = vld [vmem:[%s0 + $0x158] sm:$0xff]
  %v938 = vld [vmem:[%s0 + $0x160] sm:$0xff]
  %v939 = vld [vmem:[%s0 + $0x168] sm:$0xff]
  %v940 = vld [vmem:[%s0 + $0x170] sm:$0xff]
  %v941 = vld [vmem:[%s0 + $0x178] sm:$0xff]
  %v942 = vld [vmem:[%s0 + $0x180] sm:$0xff]
  %v943 = vld [vmem:[%s0 + $0x188] sm:$0xf]
  %v945 = vrot.slane %v534, 1
  %v946 = vperm.slane %v534, 0
  %v947 = vperm.slane %v945, 0
  %948 = vset.pattern.permute.xlu0 0
  %949 = vperm.xlu0 %948, %v946
  %v950 = vpop.permute.xlu0 %949
  %952 = vset.pattern.permute.xlu0 0
  %953 = vperm.xlu0 %952, %v947
  %v954 = vpop.permute.xlu0 %953
  %v956 = vmul.f32 %v894, %v950
  %v957 = vmul.f32 %v895, %v950
  %v958 = vmul.f32 %v896, %v950
  %v959 = vmul.f32 %v897, %v950
  %v960 = vmul.f32 %v898, %v950
  %v961 = vmul.f32 %v899, %v950
  %v962 = vmul.f32 %v900, %v950
  %v963 = vmul.f32 %v901, %v950
  %v964 = vmul.f32 %v902, %v950
  %v965 = vmul.f32 %v903, %v950
  %v966 = vmul.f32 %v904, %v950
  %v967 = vmul.f32 %v905, %v950
  %v968 = vmul.f32 %v906, %v950
  %v969 = vmul.f32 %v907, %v950
  %v970 = vmul.f32 %v908, %v950
  %v971 = vmul.f32 %v909, %v950
  %v972 = vmul.f32 %v910, %v950
  %v973 = vmul.f32 %v911, %v950
  %v974 = vmul.f32 %v912, %v950
  %v975 = vmul.f32 %v913, %v950
  %v976 = vmul.f32 %v914, %v950
  %v977 = vmul.f32 %v915, %v950
  %v978 = vmul.f32 %v916, %v950
  %v979 = vmul.f32 %v917, %v950
  %v980 = vmul.f32 %v918, %v950
  %v981 = vmul.f32 %v919, %v954
  %v982 = vmul.f32 %v920, %v954
  %v983 = vmul.f32 %v921, %v954
  %v984 = vmul.f32 %v922, %v954
  %v985 = vmul.f32 %v923, %v954
  %v986 = vmul.f32 %v924, %v954
  %v987 = vmul.f32 %v925, %v954
  %v988 = vmul.f32 %v926, %v954
  %v989 = vmul.f32 %v927, %v954
  %v990 = vmul.f32 %v928, %v954
  %v991 = vmul.f32 %v929, %v954
  %v992 = vmul.f32 %v930, %v954
  %v993 = vmul.f32 %v931, %v954
  %v994 = vmul.f32 %v932, %v954
  %v995 = vmul.f32 %v933, %v954
  %v996 = vmul.f32 %v934, %v954
  %v997 = vmul.f32 %v935, %v954
  %v998 = vmul.f32 %v936, %v954
  %v999 = vmul.f32 %v937, %v954
  %v1000 = vmul.f32 %v938, %v954
  %v1001 = vmul.f32 %v939, %v954
  %v1002 = vmul.f32 %v940, %v954
  %v1003 = vmul.f32 %v941, %v954
  %v1004 = vmul.f32 %v942, %v954
  %v1005 = vmul.f32 %v943, %v954
  %v1006 = vld [vmem:[%s2] sm:$0xff]
  %v1007 = vld [vmem:[%s2 + $0x8] sm:$0xff]
  %v1008 = vld [vmem:[%s2 + $0x10] sm:$0xff]
  %v1009 = vld [vmem:[%s2 + $0x18] sm:$0xff]
  %v1010 = vld [vmem:[%s2 + $0x20] sm:$0xff]
  %v1011 = vld [vmem:[%s2 + $0x28] sm:$0xff]
  %v1012 = vld [vmem:[%s2 + $0x30] sm:$0xff]
  %v1013 = vld [vmem:[%s2 + $0x38] sm:$0xff]
  %v1014 = vld [vmem:[%s2 + $0x40] sm:$0xff]
  %v1015 = vld [vmem:[%s2 + $0x48] sm:$0xff]
  %v1016 = vld [vmem:[%s2 + $0x50] sm:$0xff]
  %v1017 = vld [vmem:[%s2 + $0x58] sm:$0xff]
  %v1018 = vld [vmem:[%s2 + $0x60] sm:$0xff]
  %v1019 = vld [vmem:[%s2 + $0x68] sm:$0xff]
  %v1020 = vld [vmem:[%s2 + $0x70] sm:$0xff]
  %v1021 = vld [vmem:[%s2 + $0x78] sm:$0xff]
  %v1022 = vld [vmem:[%s2 + $0x80] sm:$0xff]
  %v1023 = vld [vmem:[%s2 + $0x88] sm:$0xff]
  %v1024 = vld [vmem:[%s2 + $0x90] sm:$0xff]
  %v1025 = vld [vmem:[%s2 + $0x98] sm:$0xff]
  %v1026 = vld [vmem:[%s2 + $0xa0] sm:$0xff]
  %v1027 = vld [vmem:[%s2 + $0xa8] sm:$0xff]
  %v1028 = vld [vmem:[%s2 + $0xb0] sm:$0xff]
  %v1029 = vld [vmem:[%s2 + $0xb8] sm:$0xff]
  %v1030 = vld [vmem:[%s2 + $0xc0] sm:$0xf]
  %v1031 = vld [vmem:[%s2 + $0xc8] sm:$0xff]
  %v1032 = vld [vmem:[%s2 + $0xd0] sm:$0xff]
  %v1033 = vld [vmem:[%s2 + $0xd8] sm:$0xff]
  %v1034 = vld [vmem:[%s2 + $0xe0] sm:$0xff]
  %v1035 = vld [vmem:[%s2 + $0xe8] sm:$0xff]
  %v1036 = vld [vmem:[%s2 + $0xf0] sm:$0xff]
  %v1037 = vld [vmem:[%s2 + $0xf8] sm:$0xff]
  %v1038 = vld [vmem:[%s2 + $0x100] sm:$0xff]
  %v1039 = vld [vmem:[%s2 + $0x108] sm:$0xff]
  %v1040 = vld [vmem:[%s2 + $0x110] sm:$0xff]
  %v1041 = vld [vmem:[%s2 + $0x118] sm:$0xff]
  %v1042 = vld [vmem:[%s2 + $0x120] sm:$0xff]
  %v1043 = vld [vmem:[%s2 + $0x128] sm:$0xff]
  %v1044 = vld [vmem:[%s2 + $0x130] sm:$0xff]
  %v1045 = vld [vmem:[%s2 + $0x138] sm:$0xff]
  %v1046 = vld [vmem:[%s2 + $0x140] sm:$0xff]
  %v1047 = vld [vmem:[%s2 + $0x148] sm:$0xff]
  %v1048 = vld [vmem:[%s2 + $0x150] sm:$0xff]
  %v1049 = vld [vmem:[%s2 + $0x158] sm:$0xff]
  %v1050 = vld [vmem:[%s2 + $0x160] sm:$0xff]
  %v1051 = vld [vmem:[%s2 + $0x168] sm:$0xff]
  %v1052 = vld [vmem:[%s2 + $0x170] sm:$0xff]
  %v1053 = vld [vmem:[%s2 + $0x178] sm:$0xff]
  %v1054 = vld [vmem:[%s2 + $0x180] sm:$0xff]
  %v1055 = vld [vmem:[%s2 + $0x188] sm:$0xf]
  %1056 = vset.pattern.permute.xlu0 1
  %1057 = vperm.xlu0 %1056, %v946
  %v1058 = vpop.permute.xlu0 %1057
  %1060 = vset.pattern.permute.xlu0 1
  %1061 = vperm.xlu0 %1060, %v947
  %v1062 = vpop.permute.xlu0 %1061
  %v1064 = vmul.f32 %v1006, %v1058
  %v1065 = vmul.f32 %v1007, %v1058
  %v1066 = vmul.f32 %v1008, %v1058
  %v1067 = vmul.f32 %v1009, %v1058
  %v1068 = vmul.f32 %v1010, %v1058
  %v1069 = vmul.f32 %v1011, %v1058
  %v1070 = vmul.f32 %v1012, %v1058
  %v1071 = vmul.f32 %v1013, %v1058
  %v1072 = vmul.f32 %v1014, %v1058
  %v1073 = vmul.f32 %v1015, %v1058
  %v1074 = vmul.f32 %v1016, %v1058
  %v1075 = vmul.f32 %v1017, %v1058
  %v1076 = vmul.f32 %v1018, %v1058
  %v1077 = vmul.f32 %v1019, %v1058
  %v1078 = vmul.f32 %v1020, %v1058
  %v1079 = vmul.f32 %v1021, %v1058
  %v1080 = vmul.f32 %v1022, %v1058
  %v1081 = vmul.f32 %v1023, %v1058
  %v1082 = vmul.f32 %v1024, %v1058
  %v1083 = vmul.f32 %v1025, %v1058
  %v1084 = vmul.f32 %v1026, %v1058
  %v1085 = vmul.f32 %v1027, %v1058
  %v1086 = vmul.f32 %v1028, %v1058
  %v1087 = vmul.f32 %v1029, %v1058
  %v1088 = vmul.f32 %v1030, %v1058
  %v1089 = vmul.f32 %v1031, %v1062
  %v1090 = vmul.f32 %v1032, %v1062
  %v1091 = vmul.f32 %v1033, %v1062
  %v1092 = vmul.f32 %v1034, %v1062
  %v1093 = vmul.f32 %v1035, %v1062
  %v1094 = vmul.f32 %v1036, %v1062
  %v1095 = vmul.f32 %v1037, %v1062
  %v1096 = vmul.f32 %v1038, %v1062
  %v1097 = vmul.f32 %v1039, %v1062
  %v1098 = vmul.f32 %v1040, %v1062
  %v1099 = vmul.f32 %v1041, %v1062
  %v1100 = vmul.f32 %v1042, %v1062
  %v1101 = vmul.f32 %v1043, %v1062
  %v1102 = vmul.f32 %v1044, %v1062
  %v1103 = vmul.f32 %v1045, %v1062
  %v1104 = vmul.f32 %v1046, %v1062
  %v1105 = vmul.f32 %v1047, %v1062
  %v1106 = vmul.f32 %v1048, %v1062
  %v1107 = vmul.f32 %v1049, %v1062
  %v1108 = vmul.f32 %v1050, %v1062
  %v1109 = vmul.f32 %v1051, %v1062
  %v1110 = vmul.f32 %v1052, %v1062
  %v1111 = vmul.f32 %v1053, %v1062
  %v1112 = vmul.f32 %v1054, %v1062
  %v1113 = vmul.f32 %v1055, %v1062
  %v1114 = vadd.f32 %v956, %v1064
  %v1115 = vadd.f32 %v957, %v1065
  %v1116 = vadd.f32 %v958, %v1066
  %v1117 = vadd.f32 %v959, %v1067
  %v1118 = vadd.f32 %v960, %v1068
  %v1119 = vadd.f32 %v961, %v1069
  %v1120 = vadd.f32 %v962, %v1070
  %v1121 = vadd.f32 %v963, %v1071
  %v1122 = vadd.f32 %v964, %v1072
  %v1123 = vadd.f32 %v965, %v1073
  %v1124 = vadd.f32 %v966, %v1074
  %v1125 = vadd.f32 %v967, %v1075
  %v1126 = vadd.f32 %v968, %v1076
  %v1127 = vadd.f32 %v969, %v1077
  %v1128 = vadd.f32 %v970, %v1078
  %v1129 = vadd.f32 %v971, %v1079
  %v1130 = vadd.f32 %v972, %v1080
  %v1131 = vadd.f32 %v973, %v1081
  %v1132 = vadd.f32 %v974, %v1082
  %v1133 = vadd.f32 %v975, %v1083
  %v1134 = vadd.f32 %v976, %v1084
  %v1135 = vadd.f32 %v977, %v1085
  %v1136 = vadd.f32 %v978, %v1086
  %v1137 = vadd.f32 %v979, %v1087
  %v1138 = vadd.f32 %v980, %v1088
  %v1139 = vadd.f32 %v981, %v1089
  %v1140 = vadd.f32 %v982, %v1090
  %v1141 = vadd.f32 %v983, %v1091
  %v1142 = vadd.f32 %v984, %v1092
  %v1143 = vadd.f32 %v985, %v1093
  %v1144 = vadd.f32 %v986, %v1094
  %v1145 = vadd.f32 %v987, %v1095
  %v1146 = vadd.f32 %v988, %v1096
  %v1147 = vadd.f32 %v989, %v1097
  %v1148 = vadd.f32 %v990, %v1098
  %v1149 = vadd.f32 %v991, %v1099
  %v1150 = vadd.f32 %v992, %v1100
  %v1151 = vadd.f32 %v993, %v1101
  %v1152 = vadd.f32 %v994, %v1102
  %v1153 = vadd.f32 %v995, %v1103
  %v1154 = vadd.f32 %v996, %v1104
  %v1155 = vadd.f32 %v997, %v1105
  %v1156 = vadd.f32 %v998, %v1106
  %v1157 = vadd.f32 %v999, %v1107
  %v1158 = vadd.f32 %v1000, %v1108
  %v1159 = vadd.f32 %v1001, %v1109
  %v1160 = vadd.f32 %v1002, %v1110
  %v1161 = vadd.f32 %v1003, %v1111
  %v1162 = vadd.f32 %v1004, %v1112
  %v1163 = vadd.f32 %v1005, %v1113
  %1164 = vset.pattern.permute.xlu0 2
  %1165 = vperm.xlu0 %1164, %v946
  %v1166 = vpop.permute.xlu0 %1165
  %1168 = vset.pattern.permute.xlu0 2
  %1169 = vperm.xlu0 %1168, %v947
  %v1170 = vpop.permute.xlu0 %1169
  %v1172 = vadd.f32 %v1114, %v1166
  %v1173 = vadd.f32 %v1115, %v1166
  %v1174 = vadd.f32 %v1116, %v1166
  %v1175 = vadd.f32 %v1117, %v1166
  %v1176 = vadd.f32 %v1118, %v1166
  %v1177 = vadd.f32 %v1119, %v1166
  %v1178 = vadd.f32 %v1120, %v1166
  %v1179 = vadd.f32 %v1121, %v1166
  %v1180 = vadd.f32 %v1122, %v1166
  %v1181 = vadd.f32 %v1123, %v1166
  %v1182 = vadd.f32 %v1124, %v1166
  %v1183 = vadd.f32 %v1125, %v1166
  %v1184 = vadd.f32 %v1126, %v1166
  %v1185 = vadd.f32 %v1127, %v1166
  %v1186 = vadd.f32 %v1128, %v1166
  %v1187 = vadd.f32 %v1129, %v1166
  %v1188 = vadd.f32 %v1130, %v1166
  %v1189 = vadd.f32 %v1131, %v1166
  %v1190 = vadd.f32 %v1132, %v1166
  %v1191 = vadd.f32 %v1133, %v1166
  %v1192 = vadd.f32 %v1134, %v1166
  %v1193 = vadd.f32 %v1135, %v1166
  %v1194 = vadd.f32 %v1136, %v1166
  %v1195 = vadd.f32 %v1137, %v1166
  %v1196 = vadd.f32 %v1138, %v1166
  %v1197 = vadd.f32 %v1139, %v1170
  %v1198 = vadd.f32 %v1140, %v1170
  %v1199 = vadd.f32 %v1141, %v1170
  %v1200 = vadd.f32 %v1142, %v1170
  %v1201 = vadd.f32 %v1143, %v1170
  %v1202 = vadd.f32 %v1144, %v1170
  %v1203 = vadd.f32 %v1145, %v1170
  %v1204 = vadd.f32 %v1146, %v1170
  %v1205 = vadd.f32 %v1147, %v1170
  %v1206 = vadd.f32 %v1148, %v1170
  %v1207 = vadd.f32 %v1149, %v1170
  %v1208 = vadd.f32 %v1150, %v1170
  %v1209 = vadd.f32 %v1151, %v1170
  %v1210 = vadd.f32 %v1152, %v1170
  %v1211 = vadd.f32 %v1153, %v1170
  %v1212 = vadd.f32 %v1154, %v1170
  %v1213 = vadd.f32 %v1155, %v1170
  %v1214 = vadd.f32 %v1156, %v1170
  %v1215 = vadd.f32 %v1157, %v1170
  %v1216 = vadd.f32 %v1158, %v1170
  %v1217 = vadd.f32 %v1159, %v1170
  %v1218 = vadd.f32 %v1160, %v1170
  %v1219 = vadd.f32 %v1161, %v1170
  %v1220 = vadd.f32 %v1162, %v1170
  %v1221 = vadd.f32 %v1163, %v1170
  %s1222 = scalar_lea.vmem %s7, 400
  %1223 = vst [vmem:[%s1222] sm:$0xff] %v1172
  %1224 = vst [vmem:[%s1222 + $0x8] sm:$0xff] %v1173
  %1225 = vst [vmem:[%s1222 + $0x10] sm:$0xff] %v1174
  %1226 = vst [vmem:[%s1222 + $0x18] sm:$0xff] %v1175
  %1227 = vst [vmem:[%s1222 + $0x20] sm:$0xff] %v1176
  %1228 = vst [vmem:[%s1222 + $0x28] sm:$0xff] %v1177
  %1229 = vst [vmem:[%s1222 + $0x30] sm:$0xff] %v1178
  %1230 = vst [vmem:[%s1222 + $0x38] sm:$0xff] %v1179
  %1231 = vst [vmem:[%s1222 + $0x40] sm:$0xff] %v1180
  %1232 = vst [vmem:[%s1222 + $0x48] sm:$0xff] %v1181
  %1233 = vst [vmem:[%s1222 + $0x50] sm:$0xff] %v1182
  %1234 = vst [vmem:[%s1222 + $0x58] sm:$0xff] %v1183
  %1235 = vst [vmem:[%s1222 + $0x60] sm:$0xff] %v1184
  %1236 = vst [vmem:[%s1222 + $0x68] sm:$0xff] %v1185
  %1237 = vst [vmem:[%s1222 + $0x70] sm:$0xff] %v1186
  %1238 = vst [vmem:[%s1222 + $0x78] sm:$0xff] %v1187
  %1239 = vst [vmem:[%s1222 + $0x80] sm:$0xff] %v1188
  %1240 = vst [vmem:[%s1222 + $0x88] sm:$0xff] %v1189
  %1241 = vst [vmem:[%s1222 + $0x90] sm:$0xff] %v1190
  %1242 = vst [vmem:[%s1222 + $0x98] sm:$0xff] %v1191
  %1243 = vst [vmem:[%s1222 + $0xa0] sm:$0xff] %v1192
  %1244 = vst [vmem:[%s1222 + $0xa8] sm:$0xff] %v1193
  %1245 = vst [vmem:[%s1222 + $0xb0] sm:$0xff] %v1194
  %1246 = vst [vmem:[%s1222 + $0xb8] sm:$0xff] %v1195
  %1247 = vst [vmem:[%s1222 + $0xc0] sm:$0xf] %v1196
  %1248 = vst [vmem:[%s1222 + $0xc8] sm:$0xff] %v1197
  %1249 = vst [vmem:[%s1222 + $0xd0] sm:$0xff] %v1198
  %1250 = vst [vmem:[%s1222 + $0xd8] sm:$0xff] %v1199
  %1251 = vst [vmem:[%s1222 + $0xe0] sm:$0xff] %v1200
  %1252 = vst [vmem:[%s1222 + $0xe8] sm:$0xff] %v1201
  %1253 = vst [vmem:[%s1222 + $0xf0] sm:$0xff] %v1202
  %1254 = vst [vmem:[%s1222 + $0xf8] sm:$0xff] %v1203
  %1255 = vst [vmem:[%s1222 + $0x100] sm:$0xff] %v1204
  %1256 = vst [vmem:[%s1222 + $0x108] sm:$0xff] %v1205
  %1257 = vst [vmem:[%s1222 + $0x110] sm:$0xff] %v1206
  %1258 = vst [vmem:[%s1222 + $0x118] sm:$0xff] %v1207
  %1259 = vst [vmem:[%s1222 + $0x120] sm:$0xff] %v1208
  %1260 = vst [vmem:[%s1222 + $0x128] sm:$0xff] %v1209
  %1261 = vst [vmem:[%s1222 + $0x130] sm:$0xff] %v1210
  %1262 = vst [vmem:[%s1222 + $0x138] sm:$0xff] %v1211
  %1263 = vst [vmem:[%s1222 + $0x140] sm:$0xff] %v1212
  %1264 = vst [vmem:[%s1222 + $0x148] sm:$0xff] %v1213
  %1265 = vst [vmem:[%s1222 + $0x150] sm:$0xff] %v1214
  %1266 = vst [vmem:[%s1222 + $0x158] sm:$0xff] %v1215
  %1267 = vst [vmem:[%s1222 + $0x160] sm:$0xff] %v1216
  %1268 = vst [vmem:[%s1222 + $0x168] sm:$0xff] %v1217
  %1269 = vst [vmem:[%s1222 + $0x170] sm:$0xff] %v1218
  %1270 = vst [vmem:[%s1222 + $0x178] sm:$0xff] %v1219
  %1271 = vst [vmem:[%s1222 + $0x180] sm:$0xff] %v1220
  %1272 = vst [vmem:[%s1222 + $0x188] sm:$0xf] %v1221
  %v1273 = vld [vmem:[%s0] sm:$0xff]
  %v1274 = vld [vmem:[%s0 + $0x8] sm:$0xff]
  %v1275 = vld [vmem:[%s0 + $0x10] sm:$0xff]
  %v1276 = vld [vmem:[%s0 + $0x18] sm:$0xff]
  %v1277 = vld [vmem:[%s0 + $0x20] sm:$0xff]
  %v1278 = vld [vmem:[%s0 + $0x28] sm:$0xff]
  %v1279 = vld [vmem:[%s0 + $0x30] sm:$0xff]
  %v1280 = vld [vmem:[%s0 + $0x38] sm:$0xff]
  %v1281 = vld [vmem:[%s0 + $0x40] sm:$0xff]
  %v1282 = vld [vmem:[%s0 + $0x48] sm:$0xff]
  %v1283 = vld [vmem:[%s0 + $0x50] sm:$0xff]
  %v1284 = vld [vmem:[%s0 + $0x58] sm:$0xff]
  %v1285 = vld [vmem:[%s0 + $0x60] sm:$0xff]
  %v1286 = vld [vmem:[%s0 + $0x68] sm:$0xff]
  %v1287 = vld [vmem:[%s0 + $0x70] sm:$0xff]
  %v1288 = vld [vmem:[%s0 + $0x78] sm:$0xff]
  %v1289 = vld [vmem:[%s0 + $0x80] sm:$0xff]
  %v1290 = vld [vmem:[%s0 + $0x88] sm:$0xff]
  %v1291 = vld [vmem:[%s0 + $0x90] sm:$0xff]
  %v1292 = vld [vmem:[%s0 + $0x98] sm:$0xff]
  %v1293 = vld [vmem:[%s0 + $0xa0] sm:$0xff]
  %v1294 = vld [vmem:[%s0 + $0xa8] sm:$0xff]
  %v1295 = vld [vmem:[%s0 + $0xb0] sm:$0xff]
  %v1296 = vld [vmem:[%s0 + $0xb8] sm:$0xff]
  %v1297 = vld [vmem:[%s0 + $0xc0] sm:$0xf]
  %v1298 = vld [vmem:[%s0 + $0xc8] sm:$0xff]
  %v1299 = vld [vmem:[%s0 + $0xd0] sm:$0xff]
  %v1300 = vld [vmem:[%s0 + $0xd8] sm:$0xff]
  %v1301 = vld [vmem:[%s0 + $0xe0] sm:$0xff]
  %v1302 = vld [vmem:[%s0 + $0xe8] sm:$0xff]
  %v1303 = vld [vmem:[%s0 + $0xf0] sm:$0xff]
  %v1304 = vld [vmem:[%s0 + $0xf8] sm:$0xff]
  %v1305 = vld [vmem:[%s0 + $0x100] sm:$0xff]
  %v1306 = vld [vmem:[%s0 + $0x108] sm:$0xff]
  %v1307 = vld [vmem:[%s0 + $0x110] sm:$0xff]
  %v1308 = vld [vmem:[%s0 + $0x118] sm:$0xff]
  %v1309 = vld [vmem:[%s0 + $0x120] sm:$0xff]
  %v1310 = vld [vmem:[%s0 + $0x128] sm:$0xff]
  %v1311 = vld [vmem:[%s0 + $0x130] sm:$0xff]
  %v1312 = vld [vmem:[%s0 + $0x138] sm:$0xff]
  %v1313 = vld [vmem:[%s0 + $0x140] sm:$0xff]
  %v1314 = vld [vmem:[%s0 + $0x148] sm:$0xff]
  %v1315 = vld [vmem:[%s0 + $0x150] sm:$0xff]
  %v1316 = vld [vmem:[%s0 + $0x158] sm:$0xff]
  %v1317 = vld [vmem:[%s0 + $0x160] sm:$0xff]
  %v1318 = vld [vmem:[%s0 + $0x168] sm:$0xff]
  %v1319 = vld [vmem:[%s0 + $0x170] sm:$0xff]
  %v1320 = vld [vmem:[%s0 + $0x178] sm:$0xff]
  %v1321 = vld [vmem:[%s0 + $0x180] sm:$0xff]
  %v1322 = vld [vmem:[%s0 + $0x188] sm:$0xf]
  %v1324 = vrot.slane %v614, 1
  %v1325 = vperm.slane %v614, 0
  %v1326 = vperm.slane %v1324, 0
  %1327 = vset.pattern.permute.xlu0 0
  %1328 = vperm.xlu0 %1327, %v1325
  %v1329 = vpop.permute.xlu0 %1328
  %1331 = vset.pattern.permute.xlu0 0
  %1332 = vperm.xlu0 %1331, %v1326
  %v1333 = vpop.permute.xlu0 %1332
  %v1335 = vmul.f32 %v1273, %v1329
  %v1336 = vmul.f32 %v1274, %v1329
  %v1337 = vmul.f32 %v1275, %v1329
  %v1338 = vmul.f32 %v1276, %v1329
  %v1339 = vmul.f32 %v1277, %v1329
  %v1340 = vmul.f32 %v1278, %v1329
  %v1341 = vmul.f32 %v1279, %v1329
  %v1342 = vmul.f32 %v1280, %v1329
  %v1343 = vmul.f32 %v1281, %v1329
  %v1344 = vmul.f32 %v1282, %v1329
  %v1345 = vmul.f32 %v1283, %v1329
  %v1346 = vmul.f32 %v1284, %v1329
  %v1347 = vmul.f32 %v1285, %v1329
  %v1348 = vmul.f32 %v1286, %v1329
  %v1349 = vmul.f32 %v1287, %v1329
  %v1350 = vmul.f32 %v1288, %v1329
  %v1351 = vmul.f32 %v1289, %v1329
  %v1352 = vmul.f32 %v1290, %v1329
  %v1353 = vmul.f32 %v1291, %v1329
  %v1354 = vmul.f32 %v1292, %v1329
  %v1355 = vmul.f32 %v1293, %v1329
  %v1356 = vmul.f32 %v1294, %v1329
  %v1357 = vmul.f32 %v1295, %v1329
  %v1358 = vmul.f32 %v1296, %v1329
  %v1359 = vmul.f32 %v1297, %v1329
  %v1360 = vmul.f32 %v1298, %v1333
  %v1361 = vmul.f32 %v1299, %v1333
  %v1362 = vmul.f32 %v1300, %v1333
  %v1363 = vmul.f32 %v1301, %v1333
  %v1364 = vmul.f32 %v1302, %v1333
  %v1365 = vmul.f32 %v1303, %v1333
  %v1366 = vmul.f32 %v1304, %v1333
  %v1367 = vmul.f32 %v1305, %v1333
  %v1368 = vmul.f32 %v1306, %v1333
  %v1369 = vmul.f32 %v1307, %v1333
  %v1370 = vmul.f32 %v1308, %v1333
  %v1371 = vmul.f32 %v1309, %v1333
  %v1372 = vmul.f32 %v1310, %v1333
  %v1373 = vmul.f32 %v1311, %v1333
  %v1374 = vmul.f32 %v1312, %v1333
  %v1375 = vmul.f32 %v1313, %v1333
  %v1376 = vmul.f32 %v1314, %v1333
  %v1377 = vmul.f32 %v1315, %v1333
  %v1378 = vmul.f32 %v1316, %v1333
  %v1379 = vmul.f32 %v1317, %v1333
  %v1380 = vmul.f32 %v1318, %v1333
  %v1381 = vmul.f32 %v1319, %v1333
  %v1382 = vmul.f32 %v1320, %v1333
  %v1383 = vmul.f32 %v1321, %v1333
  %v1384 = vmul.f32 %v1322, %v1333
  %v1385 = vld [vmem:[%s1] sm:$0xff]
  %v1386 = vld [vmem:[%s1 + $0x8] sm:$0xff]
  %v1387 = vld [vmem:[%s1 + $0x10] sm:$0xff]
  %v1388 = vld [vmem:[%s1 + $0x18] sm:$0xff]
  %v1389 = vld [vmem:[%s1 + $0x20] sm:$0xff]
  %v1390 = vld [vmem:[%s1 + $0x28] sm:$0xff]
  %v1391 = vld [vmem:[%s1 + $0x30] sm:$0xff]
  %v1392 = vld [vmem:[%s1 + $0x38] sm:$0xff]
  %v1393 = vld [vmem:[%s1 + $0x40] sm:$0xff]
  %v1394 = vld [vmem:[%s1 + $0x48] sm:$0xff]
  %v1395 = vld [vmem:[%s1 + $0x50] sm:$0xff]
  %v1396 = vld [vmem:[%s1 + $0x58] sm:$0xff]
  %v1397 = vld [vmem:[%s1 + $0x60] sm:$0xff]
  %v1398 = vld [vmem:[%s1 + $0x68] sm:$0xff]
  %v1399 = vld [vmem:[%s1 + $0x70] sm:$0xff]
  %v1400 = vld [vmem:[%s1 + $0x78] sm:$0xff]
  %v1401 = vld [vmem:[%s1 + $0x80] sm:$0xff]
  %v1402 = vld [vmem:[%s1 + $0x88] sm:$0xff]
  %v1403 = vld [vmem:[%s1 + $0x90] sm:$0xff]
  %v1404 = vld [vmem:[%s1 + $0x98] sm:$0xff]
  %v1405 = vld [vmem:[%s1 + $0xa0] sm:$0xff]
  %v1406 = vld [vmem:[%s1 + $0xa8] sm:$0xff]
  %v1407 = vld [vmem:[%s1 + $0xb0] sm:$0xff]
  %v1408 = vld [vmem:[%s1 + $0xb8] sm:$0xff]
  %v1409 = vld [vmem:[%s1 + $0xc0] sm:$0xf]
  %v1410 = vld [vmem:[%s1 + $0xc8] sm:$0xff]
  %v1411 = vld [vmem:[%s1 + $0xd0] sm:$0xff]
  %v1412 = vld [vmem:[%s1 + $0xd8] sm:$0xff]
  %v1413 = vld [vmem:[%s1 + $0xe0] sm:$0xff]
  %v1414 = vld [vmem:[%s1 + $0xe8] sm:$0xff]
  %v1415 = vld [vmem:[%s1 + $0xf0] sm:$0xff]
  %v1416 = vld [vmem:[%s1 + $0xf8] sm:$0xff]
  %v1417 = vld [vmem:[%s1 + $0x100] sm:$0xff]
  %v1418 = vld [vmem:[%s1 + $0x108] sm:$0xff]
  %v1419 = vld [vmem:[%s1 + $0x110] sm:$0xff]
  %v1420 = vld [vmem:[%s1 + $0x118] sm:$0xff]
  %v1421 = vld [vmem:[%s1 + $0x120] sm:$0xff]
  %v1422 = vld [vmem:[%s1 + $0x128] sm:$0xff]
  %v1423 = vld [vmem:[%s1 + $0x130] sm:$0xff]
  %v1424 = vld [vmem:[%s1 + $0x138] sm:$0xff]
  %v1425 = vld [vmem:[%s1 + $0x140] sm:$0xff]
  %v1426 = vld [vmem:[%s1 + $0x148] sm:$0xff]
  %v1427 = vld [vmem:[%s1 + $0x150] sm:$0xff]
  %v1428 = vld [vmem:[%s1 + $0x158] sm:$0xff]
  %v1429 = vld [vmem:[%s1 + $0x160] sm:$0xff]
  %v1430 = vld [vmem:[%s1 + $0x168] sm:$0xff]
  %v1431 = vld [vmem:[%s1 + $0x170] sm:$0xff]
  %v1432 = vld [vmem:[%s1 + $0x178] sm:$0xff]
  %v1433 = vld [vmem:[%s1 + $0x180] sm:$0xff]
  %v1434 = vld [vmem:[%s1 + $0x188] sm:$0xf]
  %1435 = vset.pattern.permute.xlu0 1
  %1436 = vperm.xlu0 %1435, %v1325
  %v1437 = vpop.permute.xlu0 %1436
  %1439 = vset.pattern.permute.xlu0 1
  %1440 = vperm.xlu0 %1439, %v1326
  %v1441 = vpop.permute.xlu0 %1440
  %v1443 = vmul.f32 %v1385, %v1437
  %v1444 = vmul.f32 %v1386, %v1437
  %v1445 = vmul.f32 %v1387, %v1437
  %v1446 = vmul.f32 %v1388, %v1437
  %v1447 = vmul.f32 %v1389, %v1437
  %v1448 = vmul.f32 %v1390, %v1437
  %v1449 = vmul.f32 %v1391, %v1437
  %v1450 = vmul.f32 %v1392, %v1437
  %v1451 = vmul.f32 %v1393, %v1437
  %v1452 = vmul.f32 %v1394, %v1437
  %v1453 = vmul.f32 %v1395, %v1437
  %v1454 = vmul.f32 %v1396, %v1437
  %v1455 = vmul.f32 %v1397, %v1437
  %v1456 = vmul.f32 %v1398, %v1437
  %v1457 = vmul.f32 %v1399, %v1437
  %v1458 = vmul.f32 %v1400, %v1437
  %v1459 = vmul.f32 %v1401, %v1437
  %v1460 = vmul.f32 %v1402, %v1437
  %v1461 = vmul.f32 %v1403, %v1437
  %v1462 = vmul.f32 %v1404, %v1437
  %v1463 = vmul.f32 %v1405, %v1437
  %v1464 = vmul.f32 %v1406, %v1437
  %v1465 = vmul.f32 %v1407, %v1437
  %v1466 = vmul.f32 %v1408, %v1437
  %v1467 = vmul.f32 %v1409, %v1437
  %v1468 = vmul.f32 %v1410, %v1441
  %v1469 = vmul.f32 %v1411, %v1441
  %v1470 = vmul.f32 %v1412, %v1441
  %v1471 = vmul.f32 %v1413, %v1441
  %v1472 = vmul.f32 %v1414, %v1441
  %v1473 = vmul.f32 %v1415, %v1441
  %v1474 = vmul.f32 %v1416, %v1441
  %v1475 = vmul.f32 %v1417, %v1441
  %v1476 = vmul.f32 %v1418, %v1441
  %v1477 = vmul.f32 %v1419, %v1441
  %v1478 = vmul.f32 %v1420, %v1441
  %v1479 = vmul.f32 %v1421, %v1441
  %v1480 = vmul.f32 %v1422, %v1441
  %v1481 = vmul.f32 %v1423, %v1441
  %v1482 = vmul.f32 %v1424, %v1441
  %v1483 = vmul.f32 %v1425, %v1441
  %v1484 = vmul.f32 %v1426, %v1441
  %v1485 = vmul.f32 %v1427, %v1441
  %v1486 = vmul.f32 %v1428, %v1441
  %v1487 = vmul.f32 %v1429, %v1441
  %v1488 = vmul.f32 %v1430, %v1441
  %v1489 = vmul.f32 %v1431, %v1441
  %v1490 = vmul.f32 %v1432, %v1441
  %v1491 = vmul.f32 %v1433, %v1441
  %v1492 = vmul.f32 %v1434, %v1441
  %v1493 = vadd.f32 %v1335, %v1443
  %v1494 = vadd.f32 %v1336, %v1444
  %v1495 = vadd.f32 %v1337, %v1445
  %v1496 = vadd.f32 %v1338, %v1446
  %v1497 = vadd.f32 %v1339, %v1447
  %v1498 = vadd.f32 %v1340, %v1448
  %v1499 = vadd.f32 %v1341, %v1449
  %v1500 = vadd.f32 %v1342, %v1450
  %v1501 = vadd.f32 %v1343, %v1451
  %v1502 = vadd.f32 %v1344, %v1452
  %v1503 = vadd.f32 %v1345, %v1453
  %v1504 = vadd.f32 %v1346, %v1454
  %v1505 = vadd.f32 %v1347, %v1455
  %v1506 = vadd.f32 %v1348, %v1456
  %v1507 = vadd.f32 %v1349, %v1457
  %v1508 = vadd.f32 %v1350, %v1458
  %v1509 = vadd.f32 %v1351, %v1459
  %v1510 = vadd.f32 %v1352, %v1460
  %v1511 = vadd.f32 %v1353, %v1461
  %v1512 = vadd.f32 %v1354, %v1462
  %v1513 = vadd.f32 %v1355, %v1463
  %v1514 = vadd.f32 %v1356, %v1464
  %v1515 = vadd.f32 %v1357, %v1465
  %v1516 = vadd.f32 %v1358, %v1466
  %v1517 = vadd.f32 %v1359, %v1467
  %v1518 = vadd.f32 %v1360, %v1468
  %v1519 = vadd.f32 %v1361, %v1469
  %v1520 = vadd.f32 %v1362, %v1470
  %v1521 = vadd.f32 %v1363, %v1471
  %v1522 = vadd.f32 %v1364, %v1472
  %v1523 = vadd.f32 %v1365, %v1473
  %v1524 = vadd.f32 %v1366, %v1474
  %v1525 = vadd.f32 %v1367, %v1475
  %v1526 = vadd.f32 %v1368, %v1476
  %v1527 = vadd.f32 %v1369, %v1477
  %v1528 = vadd.f32 %v1370, %v1478
  %v1529 = vadd.f32 %v1371, %v1479
  %v1530 = vadd.f32 %v1372, %v1480
  %v1531 = vadd.f32 %v1373, %v1481
  %v1532 = vadd.f32 %v1374, %v1482
  %v1533 = vadd.f32 %v1375, %v1483
  %v1534 = vadd.f32 %v1376, %v1484
  %v1535 = vadd.f32 %v1377, %v1485
  %v1536 = vadd.f32 %v1378, %v1486
  %v1537 = vadd.f32 %v1379, %v1487
  %v1538 = vadd.f32 %v1380, %v1488
  %v1539 = vadd.f32 %v1381, %v1489
  %v1540 = vadd.f32 %v1382, %v1490
  %v1541 = vadd.f32 %v1383, %v1491
  %v1542 = vadd.f32 %v1384, %v1492
  %1543 = vset.pattern.permute.xlu0 2
  %1544 = vperm.xlu0 %1543, %v1325
  %v1545 = vpop.permute.xlu0 %1544
  %1547 = vset.pattern.permute.xlu0 2
  %1548 = vperm.xlu0 %1547, %v1326
  %v1549 = vpop.permute.xlu0 %1548
  %v1551 = vadd.f32 %v1493, %v1545
  %v1552 = vadd.f32 %v1494, %v1545
  %v1553 = vadd.f32 %v1495, %v1545
  %v1554 = vadd.f32 %v1496, %v1545
  %v1555 = vadd.f32 %v1497, %v1545
  %v1556 = vadd.f32 %v1498, %v1545
  %v1557 = vadd.f32 %v1499, %v1545
  %v1558 = vadd.f32 %v1500, %v1545
  %v1559 = vadd.f32 %v1501, %v1545
  %v1560 = vadd.f32 %v1502, %v1545
  %v1561 = vadd.f32 %v1503, %v1545
  %v1562 = vadd.f32 %v1504, %v1545
  %v1563 = vadd.f32 %v1505, %v1545
  %v1564 = vadd.f32 %v1506, %v1545
  %v1565 = vadd.f32 %v1507, %v1545
  %v1566 = vadd.f32 %v1508, %v1545
  %v1567 = vadd.f32 %v1509, %v1545
  %v1568 = vadd.f32 %v1510, %v1545
  %v1569 = vadd.f32 %v1511, %v1545
  %v1570 = vadd.f32 %v1512, %v1545
  %v1571 = vadd.f32 %v1513, %v1545
  %v1572 = vadd.f32 %v1514, %v1545
  %v1573 = vadd.f32 %v1515, %v1545
  %v1574 = vadd.f32 %v1516, %v1545
  %v1575 = vadd.f32 %v1517, %v1545
  %v1576 = vadd.f32 %v1518, %v1549
  %v1577 = vadd.f32 %v1519, %v1549
  %v1578 = vadd.f32 %v1520, %v1549
  %v1579 = vadd.f32 %v1521, %v1549
  %v1580 = vadd.f32 %v1522, %v1549
  %v1581 = vadd.f32 %v1523, %v1549
  %v1582 = vadd.f32 %v1524, %v1549
  %v1583 = vadd.f32 %v1525, %v1549
  %v1584 = vadd.f32 %v1526, %v1549
  %v1585 = vadd.f32 %v1527, %v1549
  %v1586 = vadd.f32 %v1528, %v1549
  %v1587 = vadd.f32 %v1529, %v1549
  %v1588 = vadd.f32 %v1530, %v1549
  %v1589 = vadd.f32 %v1531, %v1549
  %v1590 = vadd.f32 %v1532, %v1549
  %v1591 = vadd.f32 %v1533, %v1549
  %v1592 = vadd.f32 %v1534, %v1549
  %v1593 = vadd.f32 %v1535, %v1549
  %v1594 = vadd.f32 %v1536, %v1549
  %v1595 = vadd.f32 %v1537, %v1549
  %v1596 = vadd.f32 %v1538, %v1549
  %v1597 = vadd.f32 %v1539, %v1549
  %v1598 = vadd.f32 %v1540, %v1549
  %v1599 = vadd.f32 %v1541, %v1549
  %v1600 = vadd.f32 %v1542, %v1549
  %s1601 = scalar_lea.vmem %s7, 800
  %1602 = vst [vmem:[%s1601] sm:$0xff] %v1551
  %1603 = vst [vmem:[%s1601 + $0x8] sm:$0xff] %v1552
  %1604 = vst [vmem:[%s1601 + $0x10] sm:$0xff] %v1553
  %1605 = vst [vmem:[%s1601 + $0x18] sm:$0xff] %v1554
  %1606 = vst [vmem:[%s1601 + $0x20] sm:$0xff] %v1555
  %1607 = vst [vmem:[%s1601 + $0x28] sm:$0xff] %v1556
  %1608 = vst [vmem:[%s1601 + $0x30] sm:$0xff] %v1557
  %1609 = vst [vmem:[%s1601 + $0x38] sm:$0xff] %v1558
  %1610 = vst [vmem:[%s1601 + $0x40] sm:$0xff] %v1559
  %1611 = vst [vmem:[%s1601 + $0x48] sm:$0xff] %v1560
  %1612 = vst [vmem:[%s1601 + $0x50] sm:$0xff] %v1561
  %1613 = vst [vmem:[%s1601 + $0x58] sm:$0xff] %v1562
  %1614 = vst [vmem:[%s1601 + $0x60] sm:$0xff] %v1563
  %1615 = vst [vmem:[%s1601 + $0x68] sm:$0xff] %v1564
  %1616 = vst [vmem:[%s1601 + $0x70] sm:$0xff] %v1565
  %1617 = vst [vmem:[%s1601 + $0x78] sm:$0xff] %v1566
  %1618 = vst [vmem:[%s1601 + $0x80] sm:$0xff] %v1567
  %1619 = vst [vmem:[%s1601 + $0x88] sm:$0xff] %v1568
  %1620 = vst [vmem:[%s1601 + $0x90] sm:$0xff] %v1569
  %1621 = vst [vmem:[%s1601 + $0x98] sm:$0xff] %v1570
  %1622 = vst [vmem:[%s1601 + $0xa0] sm:$0xff] %v1571
  %1623 = vst [vmem:[%s1601 + $0xa8] sm:$0xff] %v1572
  %1624 = vst [vmem:[%s1601 + $0xb0] sm:$0xff] %v1573
  %1625 = vst [vmem:[%s1601 + $0xb8] sm:$0xff] %v1574
  %1626 = vst [vmem:[%s1601 + $0xc0] sm:$0xf] %v1575
  %1627 = vst [vmem:[%s1601 + $0xc8] sm:$0xff] %v1576
  %1628 = vst [vmem:[%s1601 + $0xd0] sm:$0xff] %v1577
  %1629 = vst [vmem:[%s1601 + $0xd8] sm:$0xff] %v1578
  %1630 = vst [vmem:[%s1601 + $0xe0] sm:$0xff] %v1579
  %1631 = vst [vmem:[%s1601 + $0xe8] sm:$0xff] %v1580
  %1632 = vst [vmem:[%s1601 + $0xf0] sm:$0xff] %v1581
  %1633 = vst [vmem:[%s1601 + $0xf8] sm:$0xff] %v1582
  %1634 = vst [vmem:[%s1601 + $0x100] sm:$0xff] %v1583
  %1635 = vst [vmem:[%s1601 + $0x108] sm:$0xff] %v1584
  %1636 = vst [vmem:[%s1601 + $0x110] sm:$0xff] %v1585
  %1637 = vst [vmem:[%s1601 + $0x118] sm:$0xff] %v1586
  %1638 = vst [vmem:[%s1601 + $0x120] sm:$0xff] %v1587
  %1639 = vst [vmem:[%s1601 + $0x128] sm:$0xff] %v1588
  %1640 = vst [vmem:[%s1601 + $0x130] sm:$0xff] %v1589
  %1641 = vst [vmem:[%s1601 + $0x138] sm:$0xff] %v1590
  %1642 = vst [vmem:[%s1601 + $0x140] sm:$0xff] %v1591
  %1643 = vst [vmem:[%s1601 + $0x148] sm:$0xff] %v1592
  %1644 = vst [vmem:[%s1601 + $0x150] sm:$0xff] %v1593
  %1645 = vst [vmem:[%s1601 + $0x158] sm:$0xff] %v1594
  %1646 = vst [vmem:[%s1601 + $0x160] sm:$0xff] %v1595
  %1647 = vst [vmem:[%s1601 + $0x168] sm:$0xff] %v1596
  %1648 = vst [vmem:[%s1601 + $0x170] sm:$0xff] %v1597
  %1649 = vst [vmem:[%s1601 + $0x178] sm:$0xff] %v1598
  %1650 = vst [vmem:[%s1601 + $0x180] sm:$0xff] %v1599
  %1651 = vst [vmem:[%s1601 + $0x188] sm:$0xf] %v1600
  // Predicated region
  $region30: #{tpu_custom_call.1} parent=0 // pred_check
    _
  $region31: #{tpu_custom_call.1} parent=0 // pred_check_branch
    %1653 = sbr.rel (0) target = $region33
  $region32: #{tpu_custom_call.1} parent=0 // pred_region
    _
  $region33: #{tpu_custom_call.1} parent=0 // pred_fallthru
    _
  // Predicated region
  $region34: #{tpu_custom_call.1} parent=0 // pred_check
    _
  $region35: #{tpu_custom_call.1} parent=0 // pred_check_branch
    %1655 = sbr.rel (0) target = $region37
  $region36: #{tpu_custom_call.1} parent=0 // pred_region
    _
  $region37: #{tpu_custom_call.1} parent=0 // pred_fallthru
    _

</llo_original>
